<compile_context>
chip_gen: v6e
topology: v6e:2x2x1
jax: 0.10.0
libtpu: 0.0.40
codegen_flags: <defaults>
</compile_context>

<pallas_src>
import functools

import jax
import jax.numpy as jnp
import numpy as np
from jax.experimental import pallas as pl
from jax.experimental.pallas import tpu as pltpu


def _round_up(x, m):
    return (x + m - 1) // m * m


def _pick_chunk(S, target):
    """Largest divisor of S that is <= target (>=1)."""
    c = max(1, min(S, target))
    while S % c:
        c -= 1
    return c


# ----------------------------------------------------------------------------
# Pallas kernel: one DeepLSTM layer, sequence chunked over the grid axis.
# ----------------------------------------------------------------------------
def _layer_kernel(Tc, B, H, rev_m, unroll,
                  x_ref, m_ref, drop_ref, wx_ref, bx_ref, wh_ref,
                  out_ref, h_scr, c_scr, xp_scr):
    # h/c carry initialization (scratch persists across grid iterations).
    @pl.when(pl.program_id(0) == 0)
    def _():
        h_scr[...] = jnp.zeros_like(h_scr)
        c_scr[...] = jnp.zeros_like(c_scr)

    # Hoisted x-path projection for the whole chunk: one GEMM on the MXU.
    # Columns of wx: [lstm i|f|g|o (4H) | highway gate in (H) | highway lin (H)]
    # with all x-path biases (incl. the shared highway_gate_state bias) folded
    # into bx.  Accumulate in f32 regardless of operand dtype.
    xp_scr[...] = (
        jnp.dot(x_ref[...], wx_ref[...], preferred_element_type=jnp.float32)
        + bx_ref[...])

    drop = drop_ref[...]                      # [B, H] fix_mask dropout mask
    wh = wh_ref[...]                          # [H, 5H] fused (w_hh | w_gs)
    # TODO(synk): keep wh resident in the MXU across timesteps
    # (matmul_push_rhs / matmul_acc_lhs / matmul_pop) instead of re-issuing
    # jnp.dot every step — weight-push dominates when B << MXU width.

    def step(tl, carry):
        h, c = carry
        xb = pl.multiple_of(tl * B, B)
        xp_t = xp_scr[pl.ds(xb, B), :]                       # [B, 6H]

        ml = (Tc - 1 - tl) if rev_m else tl
        mb = pl.multiple_of(ml * B, B)
        m = m_ref[pl.ds(mb, B), :]                           # [B, 1] (VPU lane-broadcast)

        # Fused recurrent matmul: one [B,H] x [H,5H] per step, f32 accumulate.
        hp = jnp.dot(h.astype(wh.dtype), wh,
                     preferred_element_type=jnp.float32)     # [B, 5H]
        pre = xp_t[:, :5 * H] + hp

        i_g = jax.nn.sigmoid(pre[:, 0 * H:1 * H])
        f_g = jax.nn.sigmoid(pre[:, 1 * H:2 * H])
        g_g = jnp.tanh(pre[:, 2 * H:3 * H])
        o_g = jax.nn.sigmoid(pre[:, 3 * H:4 * H])
        r = jax.nn.sigmoid(pre[:, 4 * H:5 * H])
        lx = xp_t[:, 5 * H:6 * H]

        c_t = f_g * c + i_g * g_g
        h_t = o_g * jnp.tanh(c_t)
        h_t = r * h_t + (1.0 - r) * lx                       # highway connection
        h_t = drop * h_t                                     # fix_mask dropout

        h_new = m * h_t + (1.0 - m) * h                      # sequence-mask carry
        c_new = m * c_t + (1.0 - m) * c

        # Store time-flipped within the chunk; out_specs reverses the chunk
        # index, so the stored array equals inputs[l+1] of the reference.
        ob = pl.multiple_of((Tc - 1 - tl) * B, B)
        out_ref[pl.ds(ob, B), :] = h_new.astype(out_ref.dtype)
        return h_new, c_new

    h_fin, c_fin = jax.lax.fori_loop(0, Tc, step, (h_scr[...], c_scr[...]),
                                     unroll=unroll)
    h_scr[...] = h_fin
    c_scr[...] = c_fin


def _run_layer(x2d, m2d, drop, wx, bx, wh, S, B, rev_m, chunk, out_dtype):
    """x2d: [S*B, D], m2d: [S*B, 1], drop: [B, H] (B, H already padded/aligned).
    Returns [S*B, H] already time-flipped (== next layer's input)."""
    D = x2d.shape[-1]
    H = wh.shape[0]
    Tc = chunk
    nchunks = S // Tc
    unroll = min(8, Tc)
    kernel = functools.partial(_layer_kernel, Tc, B, H, rev_m, unroll)

    fwd = lambda i: (i, 0)
    rev = lambda i, n=nchunks: (n - 1 - i, 0)
    const = lambda i: (0, 0)

    # Size the scoped VMEM limit to the actual chunked working set (+headroom
    # for double-buffering), instead of relying on the default scoped limit.
    isz = lambda a: jnp.dtype(a.dtype).itemsize
    est = (2 * Tc * B * D * isz(x2d)                       # x chunk (x2 buffers)
           + 2 * Tc * B * 1 * 4                            # mask chunk
           + 2 * B * H * 4                                 # dropout mask
           + 2 * D * 6 * H * isz(wx)                       # fused x-path weights
           + 2 * 6 * H * 4                                 # fused x-path bias
           + 2 * H * 5 * H * isz(wh)                       # fused recurrent weights
           + 2 * Tc * B * H * jnp.dtype(out_dtype).itemsize  # out chunk
           + Tc * B * 6 * H * 4                            # xp scratch
           + 2 * B * H * 4)                                # h/c carry
    vmem_limit = int(min(100 << 20, max(32 << 20, 1.5 * est + (2 << 20))))

    return pl.pallas_call(
        kernel,
        out_shape=jax.ShapeDtypeStruct((S * B, H), out_dtype),
        grid=(nchunks,),
        in_specs=[
            pl.BlockSpec((Tc * B, D), fwd),                     # x chunk
            pl.BlockSpec((Tc * B, 1), rev if rev_m else fwd),   # mask chunk
            pl.BlockSpec((B, H), const),                        # dropout mask
            pl.BlockSpec((D, 6 * H), const),                    # fused x weights
            pl.BlockSpec((1, 6 * H), const),                    # fused x bias
            pl.BlockSpec((H, 5 * H), const),                    # fused rec weights
        ],
        out_specs=pl.BlockSpec((Tc * B, H), rev),               # time-flipped store
        scratch_shapes=[pltpu.VMEM((B, H), jnp.float32),        # h carry
                        pltpu.VMEM((B, H), jnp.float32),        # c carry
                        pltpu.VMEM((Tc * B, 6 * H), jnp.float32)],  # xp chunk
        compiler_params=pltpu.CompilerParams(
            dimension_semantics=("arbitrary",),
            vmem_limit_bytes=vmem_limit),
    )(x2d, m2d, drop, wx, bx, wh)


def _pad_fused(wx, bx, wh, H, H_pad, pad_rows):
    """Zero-pad each H-wide column group to H_pad (and rows where needed) so
    gate slices are lane-aligned and padded lanes stay exactly zero."""
    if H_pad == H:
        return wx, bx, wh

    def pad_groups(a, n_groups):
        parts = [a[..., g * H:(g + 1) * H] for g in range(n_groups)]
        parts = [jnp.pad(p, [(0, 0)] * (a.ndim - 1) + [(0, H_pad - H)])
                 for p in parts]
        return jnp.concatenate(parts, axis=-1)

    wx_p = pad_groups(wx, 6)
    bx_p = pad_groups(bx, 6)
    wh_p = pad_groups(wh, 5)
    wh_p = jnp.pad(wh_p, ((0, H_pad - H), (0, 0)))
    if pad_rows:                       # layer > 0: input feature dim is H_pad
        wx_p = jnp.pad(wx_p, ((0, H_pad - H), (0, 0)))
    return wx_p, bx_p, wh_p


def deep_lstm_forward(inputs0, input_mask0, dropout_masks, params, train,
                      compute_dtype=jnp.float32, chunk_timesteps=None):
    """inputs0: [S, B, input_size]; input_mask0: [S, B, 1] float 0/1 mask.
    compute_dtype: matmul-operand dtype (f32 or bf16); accumulation and gate
    math are always f32.  chunk_timesteps: sequence chunk per grid step
    (auto-picked <=32 if None; use a smaller value on v5e)."""
    S, B, D0 = inputs0.shape
    H = params[0]["wh"].shape[0]
    B_pad = _round_up(B, 8)        # sublane alignment
    H_pad = _round_up(H, 128)      # lane alignment (lane-dense gate slices/stores)
    Tc = _pick_chunk(S, chunk_timesteps if chunk_timesteps else 32)

    x = jnp.pad(inputs0, ((0, 0), (0, B_pad - B), (0, 0)))
    x = x.reshape(S * B_pad, D0).astype(compute_dtype)
    m = jnp.pad(input_mask0.astype(jnp.float32),
                ((0, 0), (0, B_pad - B), (0, 0))).reshape(S * B_pad, 1)

    for l, p in enumerate(params):
        wx, bx, wh = _pad_fused(p["wx"], p["bx"], p["wh"], H, H_pad,
                                pad_rows=(l > 0))
        wx = wx.astype(compute_dtype)
        wh = wh.astype(compute_dtype)
        drop = dropout_masks[l] if train else jnp.ones((B, H), jnp.float32)
        drop = jnp.pad(drop, ((0, B_pad - B), (0, H_pad - H)),
                       constant_values=1.0)
        # Each layer's stored output is already time-flipped (== inputs[l+1]),
        # so the next layer reads it directly; the mask order flips on odd
        # layers.  No HBM flips between layers.
        x = _run_layer(x, m, drop, wx, bx, wh, S, B_pad,
                       rev_m=(l % 2 == 1), chunk=Tc, out_dtype=compute_dtype)

    out = x.reshape(S, B_pad, H_pad)[:, :B, :H].astype(jnp.float32)
    return out.transpose(1, 0, 2)                     # [B, S, H]


# ----------------------------------------------------------------------------
# Pure-JAX reference (mirrors the PyTorch forward, Train w/ fix_mask)
# ----------------------------------------------------------------------------
def reference_forward(inputs0, input_mask0, dropout_masks, params, train):
    S, B, _ = inputs0.shape
    H = params[0]["w_hh_t"].shape[0]
    x = inputs0
    m = jnp.broadcast_to(input_mask0, (S, B, H)).astype(jnp.float32)
    for l, p in enumerate(params):
        h = jnp.zeros((B, H), jnp.float32)
        c = jnp.zeros((B, H), jnp.float32)
        outs = []
        for t in range(S):
            xt, mt = x[t], m[t]
            gates = xt @ p["w_ih_t"] + h @ p["w_hh_t"] + p["b_lstm"]
            i_g = jax.nn.sigmoid(gates[:, :H])
            f_g = jax.nn.sigmoid(gates[:, H:2 * H])
            g_g = jnp.tanh(gates[:, 2 * H:3 * H])
            o_g = jax.nn.sigmoid(gates[:, 3 * H:])
            c_t = f_g * c + i_g * g_g
            h_t = o_g * jnp.tanh(c_t)
            r = jax.nn.sigmoid(xt @ p["w_gi_t"] + p["b_gi"]
                               + h @ p["w_gs_t"] + p["b_gs"])
            lx = xt @ p["w_li_t"]
            h_t = r * h_t + (1.0 - r) * lx
            if train:
                h_t = dropout_masks[l] * h_t
            h = mt * h_t + (1.0 - mt) * h
            c = mt * c_t + (1.0 - mt) * c
            outs.append(h)
        outputs = jnp.stack(outs, 0)
        x = jnp.flip(outputs, axis=0)
        m = jnp.flip(m, axis=0)
    return jnp.transpose(x, (1, 0, 2))


# ----------------------------------------------------------------------------
# Deterministic parameter init (orthogonal, mirroring use_orthnormal_init=True)
# ----------------------------------------------------------------------------
def _orthogonal(key, shape):
    n, m = shape
    a = jax.random.normal(key, (max(n, m), min(n, m)), dtype=jnp.float32)
    q, r = jnp.linalg.qr(a)
    q = q * jnp.sign(jnp.diagonal(r))
    if n < m:
        q = q.T
    return q[:n, :m].astype(jnp.float32)


def make_params(key, input_size, hidden_size, num_layers):
    H = hidden_size
    keys = jax.random.split(key, 8 * num_layers + 2)
    kidx = 0

    def nk():
        nonlocal kidx
        k = keys[kidx]
        kidx += 1
        return k

    # highway_gate_state is a *shared* Linear across all layers in the module
    # (nn.ModuleList([nn.Linear(H, H)] * num_layers)).
    w_gs_shared = _orthogonal(nk(), (H, H))                    # torch [H, H]
    b_gs_shared = (jax.random.uniform(nk(), (1, H), minval=-1.0, maxval=1.0)
                   / np.sqrt(H)).astype(jnp.float32)

    params = []
    for l in range(num_layers):
        d_in = input_size if l == 0 else H
        w_ih = _orthogonal(nk(), (4 * H, d_in))                # torch [4H, D]
        w_hh = _orthogonal(nk(), (4 * H, H))                   # torch [4H, H]
        b_ih = (jax.random.uniform(nk(), (4 * H,), minval=-1.0, maxval=1.0)
                / np.sqrt(H)).astype(jnp.float32)
        b_hh = (jax.random.uniform(nk(), (4 * H,), minval=-1.0, maxval=1.0)
                / np.sqrt(H)).astype(jnp.float32)
        w_gi = _orthogonal(nk(), (H, d_in))
        b_gi = (jax.random.uniform(nk(), (1, H), minval=-1.0, maxval=1.0)
                / np.sqrt(d_in)).astype(jnp.float32)
        w_li = _orthogonal(nk(), (H, d_in))                    # no bias

        b_lstm = (b_ih + b_hh).reshape(1, 4 * H)

        # Fused kernel weights:
        #   wx: [D, 6H] = [w_ih^T | w_gi^T | w_li^T]
        #   bx: [1, 6H] = [b_ih+b_hh | b_gi+b_gs | 0]
        #   wh: [H, 5H] = [w_hh^T | w_gs^T]
        wx = jnp.concatenate([w_ih.T, w_gi.T, w_li.T], axis=1)
        bx = jnp.concatenate([b_lstm, b_gi + b_gs_shared,
                              jnp.zeros((1, H), jnp.float32)], axis=1)
        wh = jnp.concatenate([w_hh.T, w_gs_shared.T], axis=1)

        params.append(dict(
            # fused (kernel)
            wx=wx, bx=bx, wh=wh,
            # unfused (reference)
            w_ih_t=w_ih.T, w_hh_t=w_hh.T, b_lstm=b_lstm,
            w_gi_t=w_gi.T, b_gi=b_gi,
            w_gs_t=w_gs_shared.T, b_gs=b_gs_shared,
            w_li_t=w_li.T,
        ))
    return params


if __name__ == "__main__":
    input_size = 48      # e.g. Co * kernel_sizes
    hidden_size = 32
    num_layers = 2
    batch = 2
    seq_len = 8
    recurrent_dropout = 0.3
    train = True

    key = jax.random.PRNGKey(0)
    k_par, k_x, k_mask, k_drop = jax.random.split(key, 4)

    params = make_params(k_par, input_size, hidden_size, num_layers)

    inputs0 = jax.random.normal(k_x, (seq_len, batch, input_size), jnp.float32)
    input_mask0 = (jax.random.uniform(k_mask, (seq_len, batch, 1)) < 0.8
                   ).astype(jnp.float32)

    # fix_mask recurrent dropout masks: one [B, H] mask per layer.
    drop_keys = jax.random.split(k_drop, num_layers)
    dropout_masks = [
        (jax.random.uniform(drop_keys[l], (batch, hidden_size)) > recurrent_dropout
         ).astype(jnp.float32) / (1.0 - recurrent_dropout)
        for l in range(num_layers)
    ]

    ref = reference_forward(inputs0, input_mask0, dropout_masks, params, train)

    # f32 path: chunk=4 -> grid=(2,) exercises the chunked h/c carry + flip.
    out = deep_lstm_forward(inputs0, input_mask0, dropout_masks, params, train,
                            compute_dtype=jnp.float32, chunk_timesteps=4)
    out = jax.block_until_ready(out)
    assert out.shape == (batch, seq_len, hidden_size)
    np.testing.assert_allclose(np.asarray(out), np.asarray(ref),
                               rtol=2e-3, atol=2e-3)

    # bf16 matmul-operand path (f32 accumulation / gate math), looser tolerance.
    out_bf16 = deep_lstm_forward(inputs0, input_mask0, dropout_masks, params,
                                 train, compute_dtype=jnp.bfloat16,
                                 chunk_timesteps=4)
    out_bf16 = jax.block_until_ready(out_bf16)
    np.testing.assert_allclose(np.asarray(out_bf16), np.asarray(ref),
                               rtol=6e-2, atol=6e-2)

    print("KERNEL_OK")
</pallas_src>

<mosaic_0001>
module attributes {stable_mosaic.version = 11 : i64} {
  func.func @_layer_kernel(%arg0: i32, %arg1: memref<32x48xf32, #tpu.memory_space<vmem>>, %arg2: memref<32x1xf32, #tpu.memory_space<vmem>>, %arg3: memref<8x128xf32, #tpu.memory_space<vmem>>, %arg4: memref<48x768xf32, #tpu.memory_space<vmem>>, %arg5: memref<1x768xf32, #tpu.memory_space<vmem>>, %arg6: memref<128x640xf32, #tpu.memory_space<vmem>>, %arg7: memref<32x128xf32, #tpu.memory_space<vmem>>, %arg8: memref<8x128xf32, #tpu.memory_space<vmem>>, %arg9: memref<8x128xf32, #tpu.memory_space<vmem>>, %arg10: memref<32x768xf32, #tpu.memory_space<vmem>>) attributes {dimension_semantics = [#tpu.dimension_semantics<arbitrary>], iteration_bounds = array<i64: 2>, scalar_prefetch = 0 : i64, scratch_operands = 3 : i64, tpu.core_type = #tpu.core_type<tc>, window_params = [{transform_indices = @transform_0, window_bounds = array<i64: 32, 48>}, {transform_indices = @transform_1, window_bounds = array<i64: 32, 1>}, {pipeline_mode = #tpu.pipeline_mode<synchronous>, transform_indices = @transform_2, window_bounds = array<i64: 8, 128>}, {pipeline_mode = #tpu.pipeline_mode<synchronous>, transform_indices = @transform_3, window_bounds = array<i64: 48, 768>}, {pipeline_mode = #tpu.pipeline_mode<synchronous>, transform_indices = @transform_4, window_bounds = array<i64: 1, 768>}, {pipeline_mode = #tpu.pipeline_mode<synchronous>, transform_indices = @transform_5, window_bounds = array<i64: 128, 640>}, {transform_indices = @transform_6, window_bounds = array<i64: 32, 128>}]} {
    %c0_i32 = arith.constant 0 : i32
    %0 = arith.cmpi eq, %arg0, %c0_i32 : i32
    %1 = arith.extui %0 : i1 to i32
    %c0_i32_0 = arith.constant 0 : i32
    %2 = arith.cmpi ne, %1, %c0_i32_0 : i32
    scf.if %2 {
      %cst_80 = arith.constant 0.000000e+00 : f32
      %288 = vector.broadcast %cst_80 : f32 to vector<8x128xf32>
      %c0_81 = arith.constant 0 : index
      %c0_82 = arith.constant 0 : index
      %289 = vector.load %arg8[%c0_81, %c0_82] : memref<8x128xf32, #tpu.memory_space<vmem>>, vector<8x128xf32>
      tpu.vector_store %arg8[%c0_81, %c0_82], %288 {strides = array<i32>} : memref<8x128xf32, #tpu.memory_space<vmem>>, vector<8x128xf32>,
      %cst_83 = arith.constant 0.000000e+00 : f32
      %290 = vector.broadcast %cst_83 : f32 to vector<8x128xf32>
      %c0_84 = arith.constant 0 : index
      %c0_85 = arith.constant 0 : index
      %291 = vector.load %arg9[%c0_84, %c0_85] : memref<8x128xf32, #tpu.memory_space<vmem>>, vector<8x128xf32>
      tpu.vector_store %arg9[%c0_84, %c0_85], %290 {strides = array<i32>} : memref<8x128xf32, #tpu.memory_space<vmem>>, vector<8x128xf32>,
    } else {
    }
    %c0 = arith.constant 0 : index
    %c0_1 = arith.constant 0 : index
    %3 = vector.load %arg1[%c0, %c0_1] : memref<32x48xf32, #tpu.memory_space<vmem>>, vector<32x48xf32>
    %c0_2 = arith.constant 0 : index
    %c0_3 = arith.constant 0 : index
    %4 = vector.load %arg4[%c0_2, %c0_3] : memref<48x768xf32, #tpu.memory_space<vmem>>, vector<48x768xf32>
    %cst = arith.constant dense<0.000000e+00> : vector<32x768xf32>
    %5 = tpu.matmul %3, %4, %cst {dimension_numbers = #tpu.dot_dimension_numbers<[1], [0], [0], [1], [0, 0, 1, 1], [], []>} : vector<32x48xf32>, vector<48x768xf32>, vector<32x768xf32> -> vector<32x768xf32>
    %c0_4 = arith.constant 0 : index
    %c0_5 = arith.constant 0 : index
    %6 = vector.load %arg5[%c0_4, %c0_5] : memref<1x768xf32, #tpu.memory_space<vmem>>, vector<1x768xf32>
    %7 = vector.broadcast %6 : vector<1x768xf32> to vector<32x768xf32>
    %8 = arith.addf %5, %7 : vector<32x768xf32>
    %c0_6 = arith.constant 0 : index
    %c0_7 = arith.constant 0 : index
    %9 = vector.load %arg10[%c0_6, %c0_7] : memref<32x768xf32, #tpu.memory_space<vmem>>, vector<32x768xf32>
    tpu.vector_store %arg10[%c0_6, %c0_7], %8 {strides = array<i32>} : memref<32x768xf32, #tpu.memory_space<vmem>>, vector<32x768xf32>,
    %c0_8 = arith.constant 0 : index
    %c0_9 = arith.constant 0 : index
    %10 = vector.load %arg3[%c0_8, %c0_9] : memref<8x128xf32, #tpu.memory_space<vmem>>, vector<8x128xf32>
    %c0_10 = arith.constant 0 : index
    %c0_11 = arith.constant 0 : index
    %11 = vector.load %arg6[%c0_10, %c0_11] : memref<128x640xf32, #tpu.memory_space<vmem>>, vector<128x640xf32>
    %c0_12 = arith.constant 0 : index
    %c0_13 = arith.constant 0 : index
    %12 = vector.load %arg8[%c0_12, %c0_13] : memref<8x128xf32, #tpu.memory_space<vmem>>, vector<8x128xf32>
    %c0_14 = arith.constant 0 : index
    %c0_15 = arith.constant 0 : index
    %13 = vector.load %arg9[%c0_14, %c0_15] : memref<8x128xf32, #tpu.memory_space<vmem>>, vector<8x128xf32>
    %c0_i32_16 = arith.constant 0 : i32
    %c8_i32 = arith.constant 8 : i32
    %14 = arith.muli %c0_i32_16, %c8_i32 : i32
    %15 = tpu.assume_multiple %14, 8 : i32
    %16 = arith.index_cast %15 : i32 to index
    %c0_17 = arith.constant 0 : index
    %17 = vector.load %arg10[%16, %c0_17] : memref<32x768xf32, #tpu.memory_space<vmem>>, vector<8x768xf32>
    %c8_i32_18 = arith.constant 8 : i32
    %18 = arith.muli %c0_i32_16, %c8_i32_18 : i32
    %19 = tpu.assume_multiple %18, 8 : i32
    %20 = arith.index_cast %19 : i32 to index
    %c0_19 = arith.constant 0 : index
    %21 = vector.load %arg2[%20, %c0_19] : memref<32x1xf32, #tpu.memory_space<vmem>>, vector<8x1xf32>
    %cst_20 = arith.constant dense<0.000000e+00> : vector<8x640xf32>
    %22 = tpu.matmul %12, %11, %cst_20 {dimension_numbers = #tpu.dot_dimension_numbers<[1], [0], [0], [1], [0, 0, 1, 1], [], []>} : vector<8x128xf32>, vector<128x640xf32>, vector<8x640xf32> -> vector<8x640xf32>
    %23 = vector.extract_strided_slice %17 {offsets = [0, 0], sizes = [8, 640], strides = [1, 1]} : vector<8x768xf32> to vector<8x640xf32>
    %24 = arith.addf %23, %22 : vector<8x640xf32>
    %25 = vector.extract_strided_slice %24 {offsets = [0, 0], sizes = [8, 128], strides = [1, 1]} : vector<8x640xf32> to vector<8x128xf32>
    %26 = arith.negf %25 : vector<8x128xf32>
    %27 = math.exp %26 : vector<8x128xf32>
    %cst_21 = arith.constant 1.000000e+00 : f32
    %28 = vector.broadcast %cst_21 : f32 to vector<8x128xf32>
    %29 = arith.addf %28, %27 : vector<8x128xf32>
    %30 = arith.divf %28, %29 : vector<8x128xf32>
    %31 = vector.extract_strided_slice %24 {offsets = [0, 128], sizes = [8, 128], strides = [1, 1]} : vector<8x640xf32> to vector<8x128xf32>
    %32 = arith.negf %31 : vector<8x128xf32>
    %33 = math.exp %32 : vector<8x128xf32>
    %cst_22 = arith.constant 1.000000e+00 : f32
    %34 = vector.broadcast %cst_22 : f32 to vector<8x128xf32>
    %35 = arith.addf %34, %33 : vector<8x128xf32>
    %36 = arith.divf %34, %35 : vector<8x128xf32>
    %37 = vector.extract_strided_slice %24 {offsets = [0, 256], sizes = [8, 128], strides = [1, 1]} : vector<8x640xf32> to vector<8x128xf32>
    %38 = math.tanh %37 : vector<8x128xf32>
    %39 = vector.extract_strided_slice %24 {offsets = [0, 384], sizes = [8, 128], strides = [1, 1]} : vector<8x640xf32> to vector<8x128xf32>
    %40 = arith.negf %39 : vector<8x128xf32>
    %41 = math.exp %40 : vector<8x128xf32>
    %cst_23 = arith.constant 1.000000e+00 : f32
    %42 = vector.broadcast %cst_23 : f32 to vector<8x128xf32>
    %43 = arith.addf %42, %41 : vector<8x128xf32>
    %44 = arith.divf %42, %43 : vector<8x128xf32>
    %45 = vector.extract_strided_slice %24 {offsets = [0, 512], sizes = [8, 128], strides = [1, 1]} : vector<8x640xf32> to vector<8x128xf32>
    %46 = arith.negf %45 : vector<8x128xf32>
    %47 = math.exp %46 : vector<8x128xf32>
    %cst_24 = arith.constant 1.000000e+00 : f32
    %48 = vector.broadcast %cst_24 : f32 to vector<8x128xf32>
    %49 = arith.addf %48, %47 : vector<8x128xf32>
    %50 = arith.divf %48, %49 : vector<8x128xf32>
    %51 = vector.extract_strided_slice %17 {offsets = [0, 640], sizes = [8, 128], strides = [1, 1]} : vector<8x768xf32> to vector<8x128xf32>
    %52 = arith.mulf %36, %13 : vector<8x128xf32>
    %53 = arith.mulf %30, %38 : vector<8x128xf32>
    %54 = arith.addf %52, %53 : vector<8x128xf32>
    %55 = math.tanh %54 : vector<8x128xf32>
    %56 = arith.mulf %44, %55 : vector<8x128xf32>
    %57 = arith.mulf %50, %56 : vector<8x128xf32>
    %cst_25 = arith.constant 1.000000e+00 : f32
    %58 = vector.broadcast %cst_25 : f32 to vector<8x128xf32>
    %59 = arith.subf %58, %50 : vector<8x128xf32>
    %60 = arith.mulf %59, %51 : vector<8x128xf32>
    %61 = arith.addf %57, %60 : vector<8x128xf32>
    %62 = arith.mulf %10, %61 : vector<8x128xf32>
    %63 = vector.broadcast %21 : vector<8x1xf32> to vector<8x128xf32>
    %64 = arith.mulf %63, %62 : vector<8x128xf32>
    %cst_26 = arith.constant 1.000000e+00 : f32
    %65 = vector.broadcast %cst_26 : f32 to vector<8x1xf32>
    %66 = arith.subf %65, %21 : vector<8x1xf32>
    %67 = vector.broadcast %66 : vector<8x1xf32> to vector<8x128xf32>
    %68 = arith.mulf %67, %12 : vector<8x128xf32>
    %69 = arith.addf %64, %68 : vector<8x128xf32>
    %70 = vector.broadcast %21 : vector<8x1xf32> to vector<8x128xf32>
    %71 = arith.mulf %70, %54 : vector<8x128xf32>
    %cst_27 = arith.constant 1.000000e+00 : f32
    %72 = vector.broadcast %cst_27 : f32 to vector<8x1xf32>
    %73 = arith.subf %72, %21 : vector<8x1xf32>
    %74 = vector.broadcast %73 : vector<8x1xf32> to vector<8x128xf32>
    %75 = arith.mulf %74, %13 : vector<8x128xf32>
    %76 = arith.addf %71, %75 : vector<8x128xf32>
    %c3_i32 = arith.constant 3 : i32
    %77 = arith.subi %c3_i32, %c0_i32_16 : i32
    %c8_i32_28 = arith.constant 8 : i32
    %78 = arith.muli %77, %c8_i32_28 : i32
    %79 = tpu.assume_multiple %78, 8 : i32
    %80 = arith.index_cast %79 : i32 to index
    %c0_29 = arith.constant 0 : index
    %81 = vector.load %arg7[%80, %c0_29] : memref<32x128xf32, #tpu.memory_space<vmem>>, vector<8x128xf32>
    tpu.vector_store %arg7[%80, %c0_29], %69 {strides = array<i32>} : memref<32x128xf32, #tpu.memory_space<vmem>>, vector<8x128xf32>,
    %c1_i32 = arith.constant 1 : i32
    %c8_i32_30 = arith.constant 8 : i32
    %82 = arith.muli %c1_i32, %c8_i32_30 : i32
    %83 = tpu.assume_multiple %82, 8 : i32
    %84 = arith.index_cast %83 : i32 to index
    %c0_31 = arith.constant 0 : index
    %85 = vector.load %arg10[%84, %c0_31] : memref<32x768xf32, #tpu.memory_space<vmem>>, vector<8x768xf32>
    %c8_i32_32 = arith.constant 8 : i32
    %86 = arith.muli %c1_i32, %c8_i32_32 : i32
    %87 = tpu.assume_multiple %86, 8 : i32
    %88 = arith.index_cast %87 : i32 to index
    %c0_33 = arith.constant 0 : index
    %89 = vector.load %arg2[%88, %c0_33] : memref<32x1xf32, #tpu.memory_space<vmem>>, vector<8x1xf32>
    %cst_34 = arith.constant dense<0.000000e+00> : vector<8x640xf32>
    %90 = tpu.matmul %69, %11, %cst_34 {dimension_numbers = #tpu.dot_dimension_numbers<[1], [0], [0], [1], [0, 0, 1, 1], [], []>} : vector<8x128xf32>, vector<128x640xf32>, vector<8x640xf32> -> vector<8x640xf32>
    %91 = vector.extract_strided_slice %85 {offsets = [0, 0], sizes = [8, 640], strides = [1, 1]} : vector<8x768xf32> to vector<8x640xf32>
    %92 = arith.addf %91, %90 : vector<8x640xf32>
    %93 = vector.extract_strided_slice %92 {offsets = [0, 0], sizes = [8, 128], strides = [1, 1]} : vector<8x640xf32> to vector<8x128xf32>
    %94 = arith.negf %93 : vector<8x128xf32>
    %95 = math.exp %94 : vector<8x128xf32>
    %cst_35 = arith.constant 1.000000e+00 : f32
    %96 = vector.broadcast %cst_35 : f32 to vector<8x128xf32>
    %97 = arith.addf %96, %95 : vector<8x128xf32>
    %98 = arith.divf %96, %97 : vector<8x128xf32>
    %99 = vector.extract_strided_slice %92 {offsets = [0, 128], sizes = [8, 128], strides = [1, 1]} : vector<8x640xf32> to vector<8x128xf32>
    %100 = arith.negf %99 : vector<8x128xf32>
    %101 = math.exp %100 : vector<8x128xf32>
    %cst_36 = arith.constant 1.000000e+00 : f32
    %102 = vector.broadcast %cst_36 : f32 to vector<8x128xf32>
    %103 = arith.addf %102, %101 : vector<8x128xf32>
    %104 = arith.divf %102, %103 : vector<8x128xf32>
    %105 = vector.extract_strided_slice %92 {offsets = [0, 256], sizes = [8, 128], strides = [1, 1]} : vector<8x640xf32> to vector<8x128xf32>
    %106 = math.tanh %105 : vector<8x128xf32>
    %107 = vector.extract_strided_slice %92 {offsets = [0, 384], sizes = [8, 128], strides = [1, 1]} : vector<8x640xf32> to vector<8x128xf32>
    %108 = arith.negf %107 : vector<8x128xf32>
    %109 = math.exp %108 : vector<8x128xf32>
    %cst_37 = arith.constant 1.000000e+00 : f32
    %110 = vector.broadcast %cst_37 : f32 to vector<8x128xf32>
    %111 = arith.addf %110, %109 : vector<8x128xf32>
    %112 = arith.divf %110, %111 : vector<8x128xf32>
    %113 = vector.extract_strided_slice %92 {offsets = [0, 512], sizes = [8, 128], strides = [1, 1]} : vector<8x640xf32> to vector<8x128xf32>
    %114 = arith.negf %113 : vector<8x128xf32>
    %115 = math.exp %114 : vector<8x128xf32>
    %cst_38 = arith.constant 1.000000e+00 : f32
    %116 = vector.broadcast %cst_38 : f32 to vector<8x128xf32>
    %117 = arith.addf %116, %115 : vector<8x128xf32>
    %118 = arith.divf %116, %117 : vector<8x128xf32>
    %119 = vector.extract_strided_slice %85 {offsets = [0, 640], sizes = [8, 128], strides = [1, 1]} : vector<8x768xf32> to vector<8x128xf32>
    %120 = arith.mulf %104, %76 : vector<8x128xf32>
    %121 = arith.mulf %98, %106 : vector<8x128xf32>
    %122 = arith.addf %120, %121 : vector<8x128xf32>
    %123 = math.tanh %122 : vector<8x128xf32>
    %124 = arith.mulf %112, %123 : vector<8x128xf32>
    %125 = arith.mulf %118, %124 : vector<8x128xf32>
    %cst_39 = arith.constant 1.000000e+00 : f32
    %126 = vector.broadcast %cst_39 : f32 to vector<8x128xf32>
    %127 = arith.subf %126, %118 : vector<8x128xf32>
    %128 = arith.mulf %127, %119 : vector<8x128xf32>
    %129 = arith.addf %125, %128 : vector<8x128xf32>
    %130 = arith.mulf %10, %129 : vector<8x128xf32>
    %131 = vector.broadcast %89 : vector<8x1xf32> to vector<8x128xf32>
    %132 = arith.mulf %131, %130 : vector<8x128xf32>
    %cst_40 = arith.constant 1.000000e+00 : f32
    %133 = vector.broadcast %cst_40 : f32 to vector<8x1xf32>
    %134 = arith.subf %133, %89 : vector<8x1xf32>
    %135 = vector.broadcast %134 : vector<8x1xf32> to vector<8x128xf32>
    %136 = arith.mulf %135, %69 : vector<8x128xf32>
    %137 = arith.addf %132, %136 : vector<8x128xf32>
    %138 = vector.broadcast %89 : vector<8x1xf32> to vector<8x128xf32>
    %139 = arith.mulf %138, %122 : vector<8x128xf32>
    %cst_41 = arith.constant 1.000000e+00 : f32
    %140 = vector.broadcast %cst_41 : f32 to vector<8x1xf32>
    %141 = arith.subf %140, %89 : vector<8x1xf32>
    %142 = vector.broadcast %141 : vector<8x1xf32> to vector<8x128xf32>
    %143 = arith.mulf %142, %76 : vector<8x128xf32>
    %144 = arith.addf %139, %143 : vector<8x128xf32>
    %c3_i32_42 = arith.constant 3 : i32
    %145 = arith.subi %c3_i32_42, %c1_i32 : i32
    %c8_i32_43 = arith.constant 8 : i32
    %146 = arith.muli %145, %c8_i32_43 : i32
    %147 = tpu.assume_multiple %146, 8 : i32
    %148 = arith.index_cast %147 : i32 to index
    %c0_44 = arith.constant 0 : index
    %149 = vector.load %arg7[%148, %c0_44] : memref<32x128xf32, #tpu.memory_space<vmem>>, vector<8x128xf32>
    tpu.vector_store %arg7[%148, %c0_44], %137 {strides = array<i32>} : memref<32x128xf32, #tpu.memory_space<vmem>>, vector<8x128xf32>,
    %c2_i32 = arith.constant 2 : i32
    %c8_i32_45 = arith.constant 8 : i32
    %150 = arith.muli %c2_i32, %c8_i32_45 : i32
    %151 = tpu.assume_multiple %150, 8 : i32
    %152 = arith.index_cast %151 : i32 to index
    %c0_46 = arith.constant 0 : index
    %153 = vector.load %arg10[%152, %c0_46] : memref<32x768xf32, #tpu.memory_space<vmem>>, vector<8x768xf32>
    %c8_i32_47 = arith.constant 8 : i32
    %154 = arith.muli %c2_i32, %c8_i32_47 : i32
    %155 = tpu.assume_multiple %154, 8 : i32
    %156 = arith.index_cast %155 : i32 to index
    %c0_48 = arith.constant 0 : index
    %157 = vector.load %arg2[%156, %c0_48] : memref<32x1xf32, #tpu.memory_space<vmem>>, vector<8x1xf32>
    %cst_49 = arith.constant dense<0.000000e+00> : vector<8x640xf32>
    %158 = tpu.matmul %137, %11, %cst_49 {dimension_numbers = #tpu.dot_dimension_numbers<[1], [0], [0], [1], [0, 0, 1, 1], [], []>} : vector<8x128xf32>, vector<128x640xf32>, vector<8x640xf32> -> vector<8x640xf32>
    %159 = vector.extract_strided_slice %153 {offsets = [0, 0], sizes = [8, 640], strides = [1, 1]} : vector<8x768xf32> to vector<8x640xf32>
    %160 = arith.addf %159, %158 : vector<8x640xf32>
    %161 = vector.extract_strided_slice %160 {offsets = [0, 0], sizes = [8, 128], strides = [1, 1]} : vector<8x640xf32> to vector<8x128xf32>
    %162 = arith.negf %161 : vector<8x128xf32>
    %163 = math.exp %162 : vector<8x128xf32>
    %cst_50 = arith.constant 1.000000e+00 : f32
    %164 = vector.broadcast %cst_50 : f32 to vector<8x128xf32>
    %165 = arith.addf %164, %163 : vector<8x128xf32>
    %166 = arith.divf %164, %165 : vector<8x128xf32>
    %167 = vector.extract_strided_slice %160 {offsets = [0, 128], sizes = [8, 128], strides = [1, 1]} : vector<8x640xf32> to vector<8x128xf32>
    %168 = arith.negf %167 : vector<8x128xf32>
    %169 = math.exp %168 : vector<8x128xf32>
    %cst_51 = arith.constant 1.000000e+00 : f32
    %170 = vector.broadcast %cst_51 : f32 to vector<8x128xf32>
    %171 = arith.addf %170, %169 : vector<8x128xf32>
    %172 = arith.divf %170, %171 : vector<8x128xf32>
    %173 = vector.extract_strided_slice %160 {offsets = [0, 256], sizes = [8, 128], strides = [1, 1]} : vector<8x640xf32> to vector<8x128xf32>
    %174 = math.tanh %173 : vector<8x128xf32>
    %175 = vector.extract_strided_slice %160 {offsets = [0, 384], sizes = [8, 128], strides = [1, 1]} : vector<8x640xf32> to vector<8x128xf32>
    %176 = arith.negf %175 : vector<8x128xf32>
    %177 = math.exp %176 : vector<8x128xf32>
    %cst_52 = arith.constant 1.000000e+00 : f32
    %178 = vector.broadcast %cst_52 : f32 to vector<8x128xf32>
    %179 = arith.addf %178, %177 : vector<8x128xf32>
    %180 = arith.divf %178, %179 : vector<8x128xf32>
    %181 = vector.extract_strided_slice %160 {offsets = [0, 512], sizes = [8, 128], strides = [1, 1]} : vector<8x640xf32> to vector<8x128xf32>
    %182 = arith.negf %181 : vector<8x128xf32>
    %183 = math.exp %182 : vector<8x128xf32>
    %cst_53 = arith.constant 1.000000e+00 : f32
    %184 = vector.broadcast %cst_53 : f32 to vector<8x128xf32>
    %185 = arith.addf %184, %183 : vector<8x128xf32>
    %186 = arith.divf %184, %185 : vector<8x128xf32>
    %187 = vector.extract_strided_slice %153 {offsets = [0, 640], sizes = [8, 128], strides = [1, 1]} : vector<8x768xf32> to vector<8x128xf32>
    %188 = arith.mulf %172, %144 : vector<8x128xf32>
    %189 = arith.mulf %166, %174 : vector<8x128xf32>
    %190 = arith.addf %188, %189 : vector<8x128xf32>
    %191 = math.tanh %190 : vector<8x128xf32>
    %192 = arith.mulf %180, %191 : vector<8x128xf32>
    %193 = arith.mulf %186, %192 : vector<8x128xf32>
    %cst_54 = arith.constant 1.000000e+00 : f32
    %194 = vector.broadcast %cst_54 : f32 to vector<8x128xf32>
    %195 = arith.subf %194, %186 : vector<8x128xf32>
    %196 = arith.mulf %195, %187 : vector<8x128xf32>
    %197 = arith.addf %193, %196 : vector<8x128xf32>
    %198 = arith.mulf %10, %197 : vector<8x128xf32>
    %199 = vector.broadcast %157 : vector<8x1xf32> to vector<8x128xf32>
    %200 = arith.mulf %199, %198 : vector<8x128xf32>
    %cst_55 = arith.constant 1.000000e+00 : f32
    %201 = vector.broadcast %cst_55 : f32 to vector<8x1xf32>
    %202 = arith.subf %201, %157 : vector<8x1xf32>
    %203 = vector.broadcast %202 : vector<8x1xf32> to vector<8x128xf32>
    %204 = arith.mulf %203, %137 : vector<8x128xf32>
    %205 = arith.addf %200, %204 : vector<8x128xf32>
    %206 = vector.broadcast %157 : vector<8x1xf32> to vector<8x128xf32>
    %207 = arith.mulf %206, %190 : vector<8x128xf32>
    %cst_56 = arith.constant 1.000000e+00 : f32
    %208 = vector.broadcast %cst_56 : f32 to vector<8x1xf32>
    %209 = arith.subf %208, %157 : vector<8x1xf32>
    %210 = vector.broadcast %209 : vector<8x1xf32> to vector<8x128xf32>
    %211 = arith.mulf %210, %144 : vector<8x128xf32>
    %212 = arith.addf %207, %211 : vector<8x128xf32>
    %c3_i32_57 = arith.constant 3 : i32
    %213 = arith.subi %c3_i32_57, %c2_i32 : i32
    %c8_i32_58 = arith.constant 8 : i32
    %214 = arith.muli %213, %c8_i32_58 : i32
    %215 = tpu.assume_multiple %214, 8 : i32
    %216 = arith.index_cast %215 : i32 to index
    %c0_59 = arith.constant 0 : index
    %217 = vector.load %arg7[%216, %c0_59] : memref<32x128xf32, #tpu.memory_space<vmem>>, vector<8x128xf32>
    tpu.vector_store %arg7[%216, %c0_59], %205 {strides = array<i32>} : memref<32x128xf32, #tpu.memory_space<vmem>>, vector<8x128xf32>,
    %c3_i32_60 = arith.constant 3 : i32
    %c8_i32_61 = arith.constant 8 : i32
    %218 = arith.muli %c3_i32_60, %c8_i32_61 : i32
    %219 = tpu.assume_multiple %218, 8 : i32
    %220 = arith.index_cast %219 : i32 to index
    %c0_62 = arith.constant 0 : index
    %221 = vector.load %arg10[%220, %c0_62] : memref<32x768xf32, #tpu.memory_space<vmem>>, vector<8x768xf32>
    %c8_i32_63 = arith.constant 8 : i32
    %222 = arith.muli %c3_i32_60, %c8_i32_63 : i32
    %223 = tpu.assume_multiple %222, 8 : i32
    %224 = arith.index_cast %223 : i32 to index
    %c0_64 = arith.constant 0 : index
    %225 = vector.load %arg2[%224, %c0_64] : memref<32x1xf32, #tpu.memory_space<vmem>>, vector<8x1xf32>
    %cst_65 = arith.constant dense<0.000000e+00> : vector<8x640xf32>
    %226 = tpu.matmul %205, %11, %cst_65 {dimension_numbers = #tpu.dot_dimension_numbers<[1], [0], [0], [1], [0, 0, 1, 1], [], []>} : vector<8x128xf32>, vector<128x640xf32>, vector<8x640xf32> -> vector<8x640xf32>
    %227 = vector.extract_strided_slice %221 {offsets = [0, 0], sizes = [8, 640], strides = [1, 1]} : vector<8x768xf32> to vector<8x640xf32>
    %228 = arith.addf %227, %226 : vector<8x640xf32>
    %229 = vector.extract_strided_slice %228 {offsets = [0, 0], sizes = [8, 128], strides = [1, 1]} : vector<8x640xf32> to vector<8x128xf32>
    %230 = arith.negf %229 : vector<8x128xf32>
    %231 = math.exp %230 : vector<8x128xf32>
    %cst_66 = arith.constant 1.000000e+00 : f32
    %232 = vector.broadcast %cst_66 : f32 to vector<8x128xf32>
    %233 = arith.addf %232, %231 : vector<8x128xf32>
    %234 = arith.divf %232, %233 : vector<8x128xf32>
    %235 = vector.extract_strided_slice %228 {offsets = [0, 128], sizes = [8, 128], strides = [1, 1]} : vector<8x640xf32> to vector<8x128xf32>
    %236 = arith.negf %235 : vector<8x128xf32>
    %237 = math.exp %236 : vector<8x128xf32>
    %cst_67 = arith.constant 1.000000e+00 : f32
    %238 = vector.broadcast %cst_67 : f32 to vector<8x128xf32>
    %239 = arith.addf %238, %237 : vector<8x128xf32>
    %240 = arith.divf %238, %239 : vector<8x128xf32>
    %241 = vector.extract_strided_slice %228 {offsets = [0, 256], sizes = [8, 128], strides = [1, 1]} : vector<8x640xf32> to vector<8x128xf32>
    %242 = math.tanh %241 : vector<8x128xf32>
    %243 = vector.extract_strided_slice %228 {offsets = [0, 384], sizes = [8, 128], strides = [1, 1]} : vector<8x640xf32> to vector<8x128xf32>
    %244 = arith.negf %243 : vector<8x128xf32>
    %245 = math.exp %244 : vector<8x128xf32>
    %cst_68 = arith.constant 1.000000e+00 : f32
    %246 = vector.broadcast %cst_68 : f32 to vector<8x128xf32>
    %247 = arith.addf %246, %245 : vector<8x128xf32>
    %248 = arith.divf %246, %247 : vector<8x128xf32>
    %249 = vector.extract_strided_slice %228 {offsets = [0, 512], sizes = [8, 128], strides = [1, 1]} : vector<8x640xf32> to vector<8x128xf32>
    %250 = arith.negf %249 : vector<8x128xf32>
    %251 = math.exp %250 : vector<8x128xf32>
    %cst_69 = arith.constant 1.000000e+00 : f32
    %252 = vector.broadcast %cst_69 : f32 to vector<8x128xf32>
    %253 = arith.addf %252, %251 : vector<8x128xf32>
    %254 = arith.divf %252, %253 : vector<8x128xf32>
    %255 = vector.extract_strided_slice %221 {offsets = [0, 640], sizes = [8, 128], strides = [1, 1]} : vector<8x768xf32> to vector<8x128xf32>
    %256 = arith.mulf %240, %212 : vector<8x128xf32>
    %257 = arith.mulf %234, %242 : vector<8x128xf32>
    %258 = arith.addf %256, %257 : vector<8x128xf32>
    %259 = math.tanh %258 : vector<8x128xf32>
    %260 = arith.mulf %248, %259 : vector<8x128xf32>
    %261 = arith.mulf %254, %260 : vector<8x128xf32>
    %cst_70 = arith.constant 1.000000e+00 : f32
    %262 = vector.broadcast %cst_70 : f32 to vector<8x128xf32>
    %263 = arith.subf %262, %254 : vector<8x128xf32>
    %264 = arith.mulf %263, %255 : vector<8x128xf32>
    %265 = arith.addf %261, %264 : vector<8x128xf32>
    %266 = arith.mulf %10, %265 : vector<8x128xf32>
    %267 = vector.broadcast %225 : vector<8x1xf32> to vector<8x128xf32>
    %268 = arith.mulf %267, %266 : vector<8x128xf32>
    %cst_71 = arith.constant 1.000000e+00 : f32
    %269 = vector.broadcast %cst_71 : f32 to vector<8x1xf32>
    %270 = arith.subf %269, %225 : vector<8x1xf32>
    %271 = vector.broadcast %270 : vector<8x1xf32> to vector<8x128xf32>
    %272 = arith.mulf %271, %205 : vector<8x128xf32>
    %273 = arith.addf %268, %272 : vector<8x128xf32>
    %274 = vector.broadcast %225 : vector<8x1xf32> to vector<8x128xf32>
    %275 = arith.mulf %274, %258 : vector<8x128xf32>
    %cst_72 = arith.constant 1.000000e+00 : f32
    %276 = vector.broadcast %cst_72 : f32 to vector<8x1xf32>
    %277 = arith.subf %276, %225 : vector<8x1xf32>
    %278 = vector.broadcast %277 : vector<8x1xf32> to vector<8x128xf32>
    %279 = arith.mulf %278, %212 : vector<8x128xf32>
    %280 = arith.addf %275, %279 : vector<8x128xf32>
    %c3_i32_73 = arith.constant 3 : i32
    %281 = arith.subi %c3_i32_73, %c3_i32_60 : i32
    %c8_i32_74 = arith.constant 8 : i32
    %282 = arith.muli %281, %c8_i32_74 : i32
    %283 = tpu.assume_multiple %282, 8 : i32
    %284 = arith.index_cast %283 : i32 to index
    %c0_75 = arith.constant 0 : index
    %285 = vector.load %arg7[%284, %c0_75] : memref<32x128xf32, #tpu.memory_space<vmem>>, vector<8x128xf32>
    tpu.vector_store %arg7[%284, %c0_75], %273 {strides = array<i32>} : memref<32x128xf32, #tpu.memory_space<vmem>>, vector<8x128xf32>,
    %c4_i32 = arith.constant 4 : i32
    %c0_76 = arith.constant 0 : index
    %c0_77 = arith.constant 0 : index
    %286 = vector.load %arg8[%c0_76, %c0_77] : memref<8x128xf32, #tpu.memory_space<vmem>>, vector<8x128xf32>
    tpu.vector_store %arg8[%c0_76, %c0_77], %273 {strides = array<i32>} : memref<8x128xf32, #tpu.memory_space<vmem>>, vector<8x128xf32>,
    %c0_78 = arith.constant 0 : index
    %c0_79 = arith.constant 0 : index
    %287 = vector.load %arg9[%c0_78, %c0_79] : memref<8x128xf32, #tpu.memory_space<vmem>>, vector<8x128xf32>
    tpu.vector_store %arg9[%c0_78, %c0_79], %280 {strides = array<i32>} : memref<8x128xf32, #tpu.memory_space<vmem>>, vector<8x128xf32>,
    return
  }
  func.func @transform_0(%arg0: i32) -> (i32, i32) {
    %c0_i32 = arith.constant 0 : i32
    %c0_i32_0 = arith.constant 0 : i32
    return %arg0, %c0_i32 : i32, i32
  }
  func.func @transform_1(%arg0: i32) -> (i32, i32) {
    %c0_i32 = arith.constant 0 : i32
    %c0_i32_0 = arith.constant 0 : i32
    return %arg0, %c0_i32 : i32, i32
  }
  func.func @transform_2(%arg0: i32) -> (i32, i32) {
    %c0_i32 = arith.constant 0 : i32
    %c0_i32_0 = arith.constant 0 : i32
    %c0_i32_1 = arith.constant 0 : i32
    return %c0_i32, %c0_i32_0 : i32, i32
  }
  func.func @transform_3(%arg0: i32) -> (i32, i32) {
    %c0_i32 = arith.constant 0 : i32
    %c0_i32_0 = arith.constant 0 : i32
    %c0_i32_1 = arith.constant 0 : i32
    return %c0_i32, %c0_i32_0 : i32, i32
  }
  func.func @transform_4(%arg0: i32) -> (i32, i32) {
    %c0_i32 = arith.constant 0 : i32
    %c0_i32_0 = arith.constant 0 : i32
    %c0_i32_1 = arith.constant 0 : i32
    return %c0_i32, %c0_i32_0 : i32, i32
  }
  func.func @transform_5(%arg0: i32) -> (i32, i32) {
    %c0_i32 = arith.constant 0 : i32
    %c0_i32_0 = arith.constant 0 : i32
    %c0_i32_1 = arith.constant 0 : i32
    return %c0_i32, %c0_i32_0 : i32, i32
  }
  func.func @transform_6(%arg0: i32) -> (i32, i32) {
    %c1_i32 = arith.constant 1 : i32
    %0 = arith.subi %c1_i32, %arg0 : i32
    %c0_i32 = arith.constant 0 : i32
    %c0_i32_0 = arith.constant 0 : i32
    return %0, %c0_i32 : i32, i32
  }
}

</mosaic_0001>

<llo_original>
// kernel: tpu_custom_call.1
$region0: #{tpu_custom_call.1}
  #allocation0 [shape = 'u32[]', space=smem, size = 0x4, offset = 0x4, fixed_abs, tag = 'smem constant byte address 0x4 - core index']
  #allocation1 [shape = 'u32[144,128]{1,0:T(1,128)}', space=vmem, size = 0x12000, scoped, tag = 'internal scratch']
  #allocation2 [shape = 'f32[8,128]{1,0:T(8,128)}', space=vmem, size = 0x1000, scoped, tag = 'scratch operand']
  #allocation3 [shape = 'f32[8,128]{1,0:T(8,128)}', space=vmem, size = 0x1000, scoped, tag = 'scratch operand']
  #allocation4 [shape = 'f32[32,768]{1,0:T(8,128)}', space=vmem, size = 0x18000, scoped, tag = 'scratch operand']
  %s0 = inlined_call_operand.vmem [shape: f32[64,48], index: 0, kind: input, shape index: {}]
  %s1 = inlined_call_operand.vmem [shape: f32[64,1], index: 1, kind: input, shape index: {}]
  %s2 = inlined_call_operand.vmem [shape: f32[8,128], index: 2, kind: input, shape index: {}]
  %s3 = inlined_call_operand.hbm [shape: f32[48,768], index: 3, kind: input, shape index: {}]
  %s4 = inlined_call_operand.vmem [shape: f32[1,768], index: 4, kind: input, shape index: {}]
  %s5 = inlined_call_operand.hbm [shape: f32[128,640], index: 5, kind: input, shape index: {}]
  %s6 = inlined_call_operand.hbm [shape: f32[64,128], index: 6, kind: output, shape index: {}]
  %s7 = sld [smem:[#allocation0]]
  $region69: #{tpu_custom_call.1} parent=0
    _
  %s9 = ssub.s32 1, %s7
  %s10 = scalar_select 0, %s9, %s7
  $region1: #{tpu_custom_call.1} parent=0
    #allocation5 [shape = 'u8[147456]{0}', space=vmem, size = 0x24000, scoped, tag = 'input window, operand 3, single buffered']
    #allocation6 [shape = 's32[2]{0}', space=sflag, size = 0x8, scoped, tag = 'scoped memory for tpu_custom_call.1']
    #allocation7 [shape = 's32[2]{0}', space=sflag, size = 0x8, scoped, tag = 'scoped memory for tpu_custom_call.1']
    #allocation8 [shape = 'u8[327680]{0}', space=vmem, size = 0x50000, scoped, tag = 'input window, operand 5, single buffered']
    #allocation9 [shape = 's32[1]{0}', space=sflag, size = 0x4, scoped, tag = 'scoped memory for tpu_custom_call.1']
    #allocation10 [shape = 'u8[32768]{0}', space=vmem, size = 0x8000, scoped, tag = 'output window, operand 0']
    %11 = vsyncpa [#allocation6], 0
    %12 = vsyncpa [#allocation9], 0
    %13 = vsyncpa [#allocation7], 0
    %s14 = scalar_lea.sflag [#allocation7], 1
    %15 = vsyncpa %s14, 0
    loop: start=0, step=1, limit=4
    $region2: #{tpu_custom_call.1} parent=1 // loop_pre_header
      _
    $region3: #{tpu_custom_call.1} parent=1 // loop_header
      %s17 = sphi 0, %s21
      %p18 = scmp.ge.s32.totalorder %s17, 4
      %s27 = sphi 0, %s29
      %s30 = sphi 0, %s27
      %s31 = sphi 0, %s30
      %s47 = sphi 0, %s31
      %s53 = sphi 0, %s55
      %s56 = sphi 0, %s53
      %s57 = sphi 0, %s56
      %s73 = sphi 0, %s57
      %s77 = sphi 0, %s77
      %s79 = sphi 0, %s77
      %s80 = sphi 0, %s79
      %s94 = sphi 0, %s80
      %s98 = sphi 0, %s98
      %s100 = sphi 0, %s98
      %s101 = sphi 0, %s100
      %s115 = sphi 0, %s101
      %s119 = sphi 0, %s119
      %s121 = sphi 0, %s119
      %s122 = sphi 0, %s121
      %s136 = sphi 0, %s122
      %s140 = sphi 0, %s140
      %s142 = sphi 0, %s140
      %s143 = sphi 0, %s142
      %s157 = sphi 0, %s143
      %s165 = sphi 0, %s167
      %s168 = sphi 0, %s165
      %s169 = sphi 0, %s168
      %s185 = sphi 0, %s169
    $region4: #{tpu_custom_call.1} parent=1 // loop_header_branch
      %20 = sbr.rel (%p18) target = $region8
    $region5: #{tpu_custom_call.1} parent=1 // loop_body
      %s22 = ssub.s32 %s17, 1
      %s23 = ssub.s32 %s17, 2
      %s24 = sadd.s32 %s17, 1
      %s25 = ssub.s32 %s17, %s24
      %p26 = scmp.eq.s32.totalorder %s25, 0
      %s28 = sadd.s32 %s27, 1
      %s29 = scalar_select %p26, %s27, %s28
      %p32 = pneg %p26
      %p33 = scmp.eq.s32.totalorder %s17, 1
      %p34 = por %p32, %p33
      %p35 = scmp.ne.s32.totalorder %s27, %s30
      %p36 = scmp.eq.s32.totalorder %s17, 0
      %p37 = por %p35, %p36
      %p38 = scmp.ne.s32.totalorder %s27, %s30
      %p39 = scmp.eq.s32.totalorder %s22, 1
      %p40 = por %p38, %p39
      %p41 = scmp.ne.s32.totalorder %s30, %s31
      %p42 = scmp.eq.s32.totalorder %s22, 0
      %p43 = por %p41, %p42
      %p44 = scmp.ne.s32.totalorder %s30, %s31
      %p45 = scmp.eq.s32.totalorder %s23, 1
      %p46 = por %p44, %p45
      %p48 = scmp.ne.s32.totalorder %s31, %s47
      %p49 = scmp.eq.s32.totalorder %s23, 0
      %p50 = por %p48, %p49
      %s51 = ssub.s32 %s17, %s24
      %p52 = scmp.eq.s32.totalorder %s51, 0
      %s54 = sadd.s32 %s53, 1
      %s55 = scalar_select %p52, %s53, %s54
      %p58 = pneg %p52
      %p59 = scmp.eq.s32.totalorder %s17, 1
      %p60 = por %p58, %p59
      %p61 = scmp.ne.s32.totalorder %s53, %s56
      %p62 = scmp.eq.s32.totalorder %s17, 0
      %p63 = por %p61, %p62
      %p64 = scmp.ne.s32.totalorder %s53, %s56
      %p65 = scmp.eq.s32.totalorder %s22, 1
      %p66 = por %p64, %p65
      %p67 = scmp.ne.s32.totalorder %s56, %s57
      %p68 = scmp.eq.s32.totalorder %s22, 0
      %p69 = por %p67, %p68
      %p70 = scmp.ne.s32.totalorder %s56, %s57
      %p71 = scmp.eq.s32.totalorder %s23, 1
      %p72 = por %p70, %p71
      %p74 = scmp.ne.s32.totalorder %s57, %s73
      %p75 = scmp.eq.s32.totalorder %s23, 0
      %p76 = por %p74, %p75
      %s78 = sadd.s32 %s77, 1
      %p81 = scmp.eq.s32.totalorder %s17, 1
      %p82 = scmp.ne.s32.totalorder %s77, %s79
      %p83 = scmp.eq.s32.totalorder %s17, 0
      %p84 = por %p82, %p83
      %p85 = scmp.ne.s32.totalorder %s77, %s79
      %p86 = scmp.eq.s32.totalorder %s22, 1
      %p87 = por %p85, %p86
      %p88 = scmp.ne.s32.totalorder %s79, %s80
      %p89 = scmp.eq.s32.totalorder %s22, 0
      %p90 = por %p88, %p89
      %p91 = scmp.ne.s32.totalorder %s79, %s80
      %p92 = scmp.eq.s32.totalorder %s23, 1
      %p93 = por %p91, %p92
      %p95 = scmp.ne.s32.totalorder %s80, %s94
      %p96 = scmp.eq.s32.totalorder %s23, 0
      %p97 = por %p95, %p96
      %s99 = sadd.s32 %s98, 1
      %p102 = scmp.eq.s32.totalorder %s17, 1
      %p103 = scmp.ne.s32.totalorder %s98, %s100
      %p104 = scmp.eq.s32.totalorder %s17, 0
      %p105 = por %p103, %p104
      %p106 = scmp.ne.s32.totalorder %s98, %s100
      %p107 = scmp.eq.s32.totalorder %s22, 1
      %p108 = por %p106, %p107
      %p109 = scmp.ne.s32.totalorder %s100, %s101
      %p110 = scmp.eq.s32.totalorder %s22, 0
      %p111 = por %p109, %p110
      %p112 = scmp.ne.s32.totalorder %s100, %s101
      %p113 = scmp.eq.s32.totalorder %s23, 1
      %p114 = por %p112, %p113
      %p116 = scmp.ne.s32.totalorder %s101, %s115
      %p117 = scmp.eq.s32.totalorder %s23, 0
      %p118 = por %p116, %p117
      %s120 = sadd.s32 %s119, 1
      %p123 = scmp.eq.s32.totalorder %s17, 1
      %p124 = scmp.ne.s32.totalorder %s119, %s121
      %p125 = scmp.eq.s32.totalorder %s17, 0
      %p126 = por %p124, %p125
      %p127 = scmp.ne.s32.totalorder %s119, %s121
      %p128 = scmp.eq.s32.totalorder %s22, 1
      %p129 = por %p127, %p128
      %p130 = scmp.ne.s32.totalorder %s121, %s122
      %p131 = scmp.eq.s32.totalorder %s22, 0
      %p132 = por %p130, %p131
      %p133 = scmp.ne.s32.totalorder %s121, %s122
      %p134 = scmp.eq.s32.totalorder %s23, 1
      %p135 = por %p133, %p134
      %p137 = scmp.ne.s32.totalorder %s122, %s136
      %p138 = scmp.eq.s32.totalorder %s23, 0
      %p139 = por %p137, %p138
      %s141 = sadd.s32 %s140, 1
      %p144 = scmp.eq.s32.totalorder %s17, 1
      %p145 = scmp.ne.s32.totalorder %s140, %s142
      %p146 = scmp.eq.s32.totalorder %s17, 0
      %p147 = por %p145, %p146
      %p148 = scmp.ne.s32.totalorder %s140, %s142
      %p149 = scmp.eq.s32.totalorder %s22, 1
      %p150 = por %p148, %p149
      %p151 = scmp.ne.s32.totalorder %s142, %s143
      %p152 = scmp.eq.s32.totalorder %s22, 0
      %p153 = por %p151, %p152
      %p154 = scmp.ne.s32.totalorder %s142, %s143
      %p155 = scmp.eq.s32.totalorder %s23, 1
      %p156 = por %p154, %p155
      %p158 = scmp.ne.s32.totalorder %s143, %s157
      %p159 = scmp.eq.s32.totalorder %s23, 0
      %p160 = por %p158, %p159
      %s161 = ssub.s32 1, %s17
      %s162 = ssub.s32 1, %s24
      %s163 = ssub.s32 %s161, %s162
      %p164 = scmp.eq.s32.totalorder %s163, 0
      %s166 = sadd.s32 %s165, 1
      %s167 = scalar_select %p164, %s165, %s166
      %p170 = pneg %p164
      %p171 = scmp.eq.s32.totalorder %s17, 1
      %p172 = por %p170, %p171
      %p173 = scmp.ne.s32.totalorder %s165, %s168
      %p174 = scmp.eq.s32.totalorder %s17, 0
      %p175 = por %p173, %p174
      %p176 = scmp.ne.s32.totalorder %s165, %s168
      %p177 = scmp.eq.s32.totalorder %s22, 1
      %p178 = por %p176, %p177
      %p179 = scmp.ne.s32.totalorder %s168, %s169
      %p180 = scmp.eq.s32.totalorder %s22, 0
      %p181 = por %p179, %p180
      %p182 = scmp.ne.s32.totalorder %s168, %s169
      %p183 = scmp.eq.s32.totalorder %s23, 1
      %p184 = por %p182, %p183
      %p186 = scmp.ne.s32.totalorder %s169, %s185
      %p187 = scmp.eq.s32.totalorder %s23, 0
      %p188 = por %p186, %p187
      %p189 = scmp.le.s32.totalorder 1, %s17
      %p190 = scmp.lt.s32.totalorder %s17, 3
      %p191 = pnand %p189, %p190
      %p192 = pneg %p191
      // Predicated region
      $region9: #{tpu_custom_call.1} parent=5 // pred_check
        _
      $region10: #{tpu_custom_call.1} parent=5 // pred_check_branch
        %194 = sbr.rel (%p191) target = $region12
      $region11: #{tpu_custom_call.1} parent=5 // pred_region
        %s195 = ssub.s32 %s17, 1
        // Predicated region
        $region13: #{tpu_custom_call.1} parent=11 // pred_check
          %p196 = pneg %p90
        $region14: #{tpu_custom_call.1} parent=11 // pred_check_branch
          %198 = sbr.rel (%p196) target = $region16
        $region15: #{tpu_custom_call.1} parent=11 // pred_region
          _
        $region16: #{tpu_custom_call.1} parent=11 // pred_fallthru
          _
        // Predicated region
        $region17: #{tpu_custom_call.1} parent=11 // pred_check
          %p199 = pneg %p111
        $region18: #{tpu_custom_call.1} parent=11 // pred_check_branch
          %201 = sbr.rel (%p199) target = $region20
        $region19: #{tpu_custom_call.1} parent=11 // pred_region
          %s203 = ssub.s32 4608, 4608
          %204 = vsyncadd [#allocation6], %s203
          %s205 = sshll.u32 [#allocation5], 4
          %s206 = int_to_ptr.vmem [resolvable:$true] %s205
          %211 = dma.hbm_to_vmem [thread:$0]  %s3, 4608, %s206, [#allocation6], 768, 768, 48
        $region20: #{tpu_custom_call.1} parent=11 // pred_fallthru
          _
        // Predicated region
        $region21: #{tpu_custom_call.1} parent=11 // pred_check
          %p212 = pneg %p132
        $region22: #{tpu_custom_call.1} parent=11 // pred_check_branch
          %214 = sbr.rel (%p212) target = $region24
        $region23: #{tpu_custom_call.1} parent=11 // pred_region
          _
        $region24: #{tpu_custom_call.1} parent=11 // pred_fallthru
          _
        // Predicated region
        $region25: #{tpu_custom_call.1} parent=11 // pred_check
          %p215 = pneg %p153
        $region26: #{tpu_custom_call.1} parent=11 // pred_check_branch
          %217 = sbr.rel (%p215) target = $region28
        $region27: #{tpu_custom_call.1} parent=11 // pred_region
          %s219 = ssub.s32 10240, 10240
          %220 = vsyncadd [#allocation9], %s219
          %s221 = sshll.u32 [#allocation8], 4
          %s222 = int_to_ptr.vmem [resolvable:$true] %s221
          %227 = dma.hbm_to_vmem [thread:$0]  %s5, 10240, %s222, [#allocation9], 640, 640, 40
        $region28: #{tpu_custom_call.1} parent=11 // pred_fallthru
          _
      $region12: #{tpu_custom_call.1} parent=5 // pred_fallthru
        _
      %p228 = scmp.lt.s32.totalorder %s17, 2
      // Predicated region
      $region29: #{tpu_custom_call.1} parent=5 // pred_check
        %p229 = pneg %p228
      $region30: #{tpu_custom_call.1} parent=5 // pred_check_branch
        %231 = sbr.rel (%p229) target = $region32
      $region31: #{tpu_custom_call.1} parent=5 // pred_region
        // Predicated region
        $region33: #{tpu_custom_call.1} parent=31 // pred_check
          %p232 = pneg %p37
        $region34: #{tpu_custom_call.1} parent=31 // pred_check_branch
          %234 = sbr.rel (%p232) target = $region36
        $region35: #{tpu_custom_call.1} parent=31 // pred_region
          %s235 = smul.u32 4, %s17
          %p236 = scmp.lt.s32.totalorder %s235, 7
          %s237 = scalar_select %p236, %s235, 7
          %s238 = smul.addr %s237, 8
          %s239 = scalar_lea.vmem %s0, %s238
          %s240 = smul.u32 4, %s17
        $region36: #{tpu_custom_call.1} parent=31 // pred_fallthru
          _
        // Predicated region
        $region37: #{tpu_custom_call.1} parent=31 // pred_check
          %p241 = pneg %p63
        $region38: #{tpu_custom_call.1} parent=31 // pred_check_branch
          %243 = sbr.rel (%p241) target = $region40
        $region39: #{tpu_custom_call.1} parent=31 // pred_region
          %s244 = smul.u32 4, %s17
          %p245 = scmp.lt.s32.totalorder %s244, 7
          %s246 = scalar_select %p245, %s244, 7
          %s247 = smul.addr %s246, 8
          %s248 = scalar_lea.vmem %s1, %s247
          %s249 = smul.u32 4, %s17
        $region40: #{tpu_custom_call.1} parent=31 // pred_fallthru
          _
      $region32: #{tpu_custom_call.1} parent=5 // pred_fallthru
        _
      %p250 = scmp.le.s32.totalorder 1, %s17
      %p251 = scmp.lt.s32.totalorder %s17, 3
      %p252 = pnand %p250, %p251
      %p253 = pneg %p252
      // Predicated region
      $region41: #{tpu_custom_call.1} parent=5 // pred_check
        _
      $region42: #{tpu_custom_call.1} parent=5 // pred_check_branch
        %255 = sbr.rel (%p252) target = $region44
      $region43: #{tpu_custom_call.1} parent=5 // pred_region
        %s256 = ssub.s32 %s17, 1
        // Predicated region
        $region45: #{tpu_custom_call.1} parent=43 // pred_check
          %p257 = pneg %p111
        $region46: #{tpu_custom_call.1} parent=43 // pred_check_branch
          %259 = sbr.rel (%p257) target = $region48
        $region47: #{tpu_custom_call.1} parent=43 // pred_region
          %260 = dma.done [#allocation6], 4608
        $region48: #{tpu_custom_call.1} parent=43 // pred_fallthru
          _
        // Predicated region
        $region49: #{tpu_custom_call.1} parent=43 // pred_check
          %p261 = pneg %p153
        $region50: #{tpu_custom_call.1} parent=43 // pred_check_branch
          %263 = sbr.rel (%p261) target = $region52
        $region51: #{tpu_custom_call.1} parent=43 // pred_region
          %264 = dma.done [#allocation9], 10240
        $region52: #{tpu_custom_call.1} parent=43 // pred_fallthru
          _
        %s265 = smul.u32 4, %s22
        %p266 = scmp.lt.s32.totalorder %s265, 7
        %s267 = scalar_select %p266, %s265, 7
        %s268 = smul.addr %s267, 8
        %s269 = scalar_lea.vmem %s0, %s268
        %p270 = pneg %p43
        %p271 = pneg %p40
        %s272 = smul.u32 4, %s22
        %p273 = scmp.lt.s32.totalorder %s272, 7
        %s274 = scalar_select %p273, %s272, 7
        %s275 = smul.addr %s274, 8
        %s276 = scalar_lea.vmem %s1, %s275
        %p277 = pneg %p69
        %p278 = pneg %p66
        %p279 = pneg %p90
        %p280 = pneg %p87
        %p281 = pneg %p111
        %p282 = pneg %p108
        %p283 = pneg %p132
        %p284 = pneg %p129
        %p285 = pneg %p153
        %p286 = pneg %p150
        %p287 = pneg %p181
        %p288 = pneg %p178
        %s289 = sand.u32 %s168, 1
        %s290 = scalar_lea.sflag [#allocation7], %s289
        %s291 = sand.u32 %s168, 1
        %s292 = smul.addr %s291, 32
        %s293 = scalar_lea.vmem [#allocation10], %s292
        %s294 = smul.u32 4, %s22
        %p295 = scmp.lt.s32.totalorder %s294, 7
        %s296 = scalar_select %p295, %s294, 7
        %s297 = smul.addr %s296, 8
        %s298 = scalar_lea.vmem %s0, %s297
        %s299 = smul.u32 4, %s22
        %s300 = smul.u32 4, %s22
        %p301 = scmp.lt.s32.totalorder %s300, 7
        %s302 = scalar_select %p301, %s300, 7
        %s303 = smul.addr %s302, 8
        %s304 = scalar_lea.vmem %s1, %s303
        %s305 = smul.u32 4, %s22
        %s306 = ssub.s32 1, %s22
        %s307 = smul.u32 4, %s306
        %p308 = scmp.eq.s32.totalorder %s22, 0
        // Predicated region
        $region53: #{tpu_custom_call.1} parent=43 // pred_check
          %p309 = pneg %p308
        $region54: #{tpu_custom_call.1} parent=43 // pred_check_branch
          %311 = sbr.rel (%p309) target = $region56
        $region55: #{tpu_custom_call.1} parent=43 // pred_region
          %312 = vst [vmem:[#allocation2] sm:$0xff] 0.0
          %313 = vst [vmem:[#allocation3] sm:$0xff] 0.0
        $region56: #{tpu_custom_call.1} parent=43 // pred_fallthru
          _
        %v314 = vld [vmem:[%s298] sm:$0xff]
        %v315 = vld [vmem:[%s298 + $0x8] sm:$0xff]
        %v316 = vld [vmem:[%s298 + $0x10] sm:$0xff]
        %v317 = vld [vmem:[%s298 + $0x18] sm:$0xff]
        %v318 = vld [vmem:[#allocation5] sm:$0xff]
        %v319 = vld [vmem:[#allocation5 + $0x8] sm:$0xff]
        %v320 = vld [vmem:[#allocation5 + $0x10] sm:$0xff]
        %v321 = vld [vmem:[#allocation5 + $0x18] sm:$0xff]
        %v322 = vld [vmem:[#allocation5 + $0x20] sm:$0xff]
        %v323 = vld [vmem:[#allocation5 + $0x28] sm:$0xff]
        %v324 = vld [vmem:[#allocation5 + $0x30] sm:$0xff]
        %v325 = vld [vmem:[#allocation5 + $0x38] sm:$0xff]
        %v326 = vld [vmem:[#allocation5 + $0x40] sm:$0xff]
        %v327 = vld [vmem:[#allocation5 + $0x48] sm:$0xff]
        %v328 = vld [vmem:[#allocation5 + $0x50] sm:$0xff]
        %v329 = vld [vmem:[#allocation5 + $0x58] sm:$0xff]
        %v330 = vld [vmem:[#allocation5 + $0x60] sm:$0xff]
        %v331 = vld [vmem:[#allocation5 + $0x68] sm:$0xff]
        %v332 = vld [vmem:[#allocation5 + $0x70] sm:$0xff]
        %v333 = vld [vmem:[#allocation5 + $0x78] sm:$0xff]
        %v334 = vld [vmem:[#allocation5 + $0x80] sm:$0xff]
        %v335 = vld [vmem:[#allocation5 + $0x88] sm:$0xff]
        %v336 = vld [vmem:[#allocation5 + $0x90] sm:$0xff]
        %v337 = vld [vmem:[#allocation5 + $0x98] sm:$0xff]
        %v338 = vld [vmem:[#allocation5 + $0xa0] sm:$0xff]
        %v339 = vld [vmem:[#allocation5 + $0xa8] sm:$0xff]
        %v340 = vld [vmem:[#allocation5 + $0xb0] sm:$0xff]
        %v341 = vld [vmem:[#allocation5 + $0xb8] sm:$0xff]
        %v342 = vld [vmem:[#allocation5 + $0xc0] sm:$0xff]
        %v343 = vld [vmem:[#allocation5 + $0xc8] sm:$0xff]
        %v344 = vld [vmem:[#allocation5 + $0xd0] sm:$0xff]
        %v345 = vld [vmem:[#allocation5 + $0xd8] sm:$0xff]
        %v346 = vld [vmem:[#allocation5 + $0xe0] sm:$0xff]
        %v347 = vld [vmem:[#allocation5 + $0xe8] sm:$0xff]
        %v348 = vld [vmem:[#allocation5 + $0xf0] sm:$0xff]
        %v349 = vld [vmem:[#allocation5 + $0xf8] sm:$0xff]
        %v350 = vld [vmem:[#allocation5 + $0x100] sm:$0xff]
        %v351 = vld [vmem:[#allocation5 + $0x108] sm:$0xff]
        %v352 = vld [vmem:[#allocation5 + $0x110] sm:$0xff]
        %v353 = vld [vmem:[#allocation5 + $0x118] sm:$0xff]
        %v354 = vld [vmem:[%s4] sm:$0x3f]
        %v356 = vlaneseq
        %v357 = vshrl.u32 %v356, 7
        %v358 = vsub.s32 0, %v357
        %v359 = vrot.slane %v354, %v358
        %v360 = vlaneseq
        %v361 = vshrl.u32 %v360, 7
        %v362 = vsub.s32 1, %v361
        %v363 = vrot.slane %v354, %v362
        %v364 = vlaneseq
        %v365 = vshrl.u32 %v364, 7
        %v366 = vsub.s32 2, %v365
        %v367 = vrot.slane %v354, %v366
        %v368 = vlaneseq
        %v369 = vshrl.u32 %v368, 7
        %v370 = vsub.s32 3, %v369
        %v371 = vrot.slane %v354, %v370
        %v372 = vlaneseq
        %v373 = vshrl.u32 %v372, 7
        %v374 = vsub.s32 4, %v373
        %v375 = vrot.slane %v354, %v374
        %v376 = vlaneseq
        %v377 = vshrl.u32 %v376, 7
        %v378 = vsub.s32 5, %v377
        %v379 = vrot.slane %v354, %v378
        %vm386 = vcmask 392192
        %v388 = vsel %vm386, %v314, 0
        %v391 = vsel %vm386, %v315, 0
        %v394 = vsel %vm386, %v316, 0
        %v397 = vsel %vm386, %v317, 0
        %399 = vmatprep.subr.mxu0 0.0
        %400 = vmatpush1.msra.mxu0 0.0
        %401 = vmatprep.subr.mxu0 0.0
        %402 = vmatpush1.msra.mxu0 0.0
        %403 = vmatprep.subr.mxu0 0.0
        %404 = vmatpush1.msra.mxu0 0.0
        %405 = vmatprep.subr.mxu0 0.0
        %406 = vmatpush1.msra.mxu0 0.0
        %407 = vmatprep.subr.mxu0 0.0
        %408 = vmatpush1.msra.mxu0 0.0
        %409 = vmatprep.subr.mxu0 0.0
        %410 = vmatpush1.msra.mxu0 0.0
        %411 = vmatprep.subr.mxu0 0.0
        %412 = vmatpush1.msra.mxu0 0.0
        %413 = vmatprep.subr.mxu0 0.0
        %414 = vmatpush1.msra.mxu0 0.0
        %415 = vmatprep.subr.mxu0 0.0
        %416 = vmatpush1.msra.mxu0 0.0
        %417 = vmatprep.subr.mxu0 0.0
        %418 = vmatpush1.msra.mxu0 0.0
        %419 = vmatprep.subr.mxu0 %v349
        %420 = vmatpush1.msra.mxu0 %v348
        %421 = vmatprep.subr.mxu0 %v343
        %422 = vmatpush1.msra.mxu0 %v342
        %423 = vmatprep.subr.mxu0 %v337
        %424 = vmatpush1.msra.mxu0 %v336
        %425 = vmatprep.subr.mxu0 %v331
        %426 = vmatpush1.msra.mxu0 %v330
        %427 = vmatprep.subr.mxu0 %v325
        %428 = vmatpush1.msra.mxu0 %v324
        %429 = vmatprep.subr.mxu0 %v319
        %430 = vmatpush1.msra.mxu0 %v318
        %431 = vmatprep.subr.mxu0 0.0
        %432 = vmatpush2.msra.mxu0 0.0
        %433 = vmatprep.subr.mxu0 0.0
        %434 = vmatpush2.msra.mxu0 0.0
        %435 = vmatprep.subr.mxu0 0.0
        %436 = vmatpush2.msra.mxu0 0.0
        %437 = vmatprep.subr.mxu0 0.0
        %438 = vmatpush2.msra.mxu0 0.0
        %439 = vmatprep.subr.mxu0 0.0
        %440 = vmatpush2.msra.mxu0 0.0
        %441 = vmatprep.subr.mxu0 0.0
        %442 = vmatpush2.msra.mxu0 0.0
        %443 = vmatprep.subr.mxu0 0.0
        %444 = vmatpush2.msra.mxu0 0.0
        %445 = vmatprep.subr.mxu0 0.0
        %446 = vmatpush2.msra.mxu0 0.0
        %447 = vmatprep.subr.mxu0 0.0
        %448 = vmatpush2.msra.mxu0 0.0
        %449 = vmatprep.subr.mxu0 0.0
        %450 = vmatpush2.msra.mxu0 0.0
        %451 = vmatprep.subr.mxu0 0.0
        %452 = vmatpush2.msra.mxu0 0.0
        %453 = vmatprep.subr.mxu0 0.0
        %454 = vmatpush2.msra.mxu0 0.0
        %455 = vmatprep.subr.mxu0 0.0
        %456 = vmatpush2.msra.mxu0 0.0
        %457 = vmatprep.subr.mxu0 0.0
        %458 = vmatpush2.msra.mxu0 0.0
        %459 = vmatprep.subr.mxu0 0.0
        %460 = vmatpush2.msra.mxu0 0.0
        %461 = vmatprep.subr.mxu0 0.0
        %462 = vmatpush2.msra.mxu0 0.0
        %463 = vmatprep.mubr.f32.mxu0 0.0
        %464 = vmatmul.mubr.f32.gmra.mxu0 %v388
        %v465 = vpop.f32.mrf.mxu0
        %v466 = vadd.f32 %v359, %v465
        %v467 = vpop.f32.mrf.mxu0
        %v468 = vadd.f32 %v363, %v467
        %469 = vmatprep.mubr.f32.mxu0 0.0
        %470 = vmatmul.mubr.f32.gmra.mxu0 %v391
        %v471 = vpop.f32.mrf.mxu0
        %v472 = vadd.f32 %v359, %v471
        %v473 = vpop.f32.mrf.mxu0
        %v474 = vadd.f32 %v363, %v473
        %475 = vmatprep.mubr.f32.mxu0 0.0
        %476 = vmatmul.mubr.f32.gmra.mxu0 %v394
        %v477 = vpop.f32.mrf.mxu0
        %v478 = vadd.f32 %v359, %v477
        %v479 = vpop.f32.mrf.mxu0
        %v480 = vadd.f32 %v363, %v479
        %481 = vmatprep.mubr.f32.mxu0 0.0
        %482 = vmatmul.mubr.f32.gmra.mxu0 %v397
        %v483 = vpop.f32.mrf.mxu0
        %v484 = vadd.f32 %v359, %v483
        %v485 = vpop.f32.mrf.mxu0
        %v486 = vadd.f32 %v363, %v485
        %487 = vdwg.mxu0
        %488 = vmatprep.subr.mxu0 0.0
        %489 = vmatpush1.msra.mxu0 0.0
        %490 = vmatprep.subr.mxu0 0.0
        %491 = vmatpush1.msra.mxu0 0.0
        %492 = vmatprep.subr.mxu0 0.0
        %493 = vmatpush1.msra.mxu0 0.0
        %494 = vmatprep.subr.mxu0 0.0
        %495 = vmatpush1.msra.mxu0 0.0
        %496 = vmatprep.subr.mxu0 0.0
        %497 = vmatpush1.msra.mxu0 0.0
        %498 = vmatprep.subr.mxu0 0.0
        %499 = vmatpush1.msra.mxu0 0.0
        %500 = vmatprep.subr.mxu0 0.0
        %501 = vmatpush1.msra.mxu0 0.0
        %502 = vmatprep.subr.mxu0 0.0
        %503 = vmatpush1.msra.mxu0 0.0
        %504 = vmatprep.subr.mxu0 0.0
        %505 = vmatpush1.msra.mxu0 0.0
        %506 = vmatprep.subr.mxu0 0.0
        %507 = vmatpush1.msra.mxu0 0.0
        %508 = vmatprep.subr.mxu0 %v351
        %509 = vmatpush1.msra.mxu0 %v350
        %510 = vmatprep.subr.mxu0 %v345
        %511 = vmatpush1.msra.mxu0 %v344
        %512 = vmatprep.subr.mxu0 %v339
        %513 = vmatpush1.msra.mxu0 %v338
        %514 = vmatprep.subr.mxu0 %v333
        %515 = vmatpush1.msra.mxu0 %v332
        %516 = vmatprep.subr.mxu0 %v327
        %517 = vmatpush1.msra.mxu0 %v326
        %518 = vmatprep.subr.mxu0 %v321
        %519 = vmatpush1.msra.mxu0 %v320
        %520 = vmatprep.subr.mxu0 0.0
        %521 = vmatpush2.msra.mxu0 0.0
        %522 = vmatprep.subr.mxu0 0.0
        %523 = vmatpush2.msra.mxu0 0.0
        %524 = vmatprep.subr.mxu0 0.0
        %525 = vmatpush2.msra.mxu0 0.0
        %526 = vmatprep.subr.mxu0 0.0
        %527 = vmatpush2.msra.mxu0 0.0
        %528 = vmatprep.subr.mxu0 0.0
        %529 = vmatpush2.msra.mxu0 0.0
        %530 = vmatprep.subr.mxu0 0.0
        %531 = vmatpush2.msra.mxu0 0.0
        %532 = vmatprep.subr.mxu0 0.0
        %533 = vmatpush2.msra.mxu0 0.0
        %534 = vmatprep.subr.mxu0 0.0
        %535 = vmatpush2.msra.mxu0 0.0
        %536 = vmatprep.subr.mxu0 0.0
        %537 = vmatpush2.msra.mxu0 0.0
        %538 = vmatprep.subr.mxu0 0.0
        %539 = vmatpush2.msra.mxu0 0.0
        %540 = vmatprep.subr.mxu0 0.0
        %541 = vmatpush2.msra.mxu0 0.0
        %542 = vmatprep.subr.mxu0 0.0
        %543 = vmatpush2.msra.mxu0 0.0
        %544 = vmatprep.subr.mxu0 0.0
        %545 = vmatpush2.msra.mxu0 0.0
        %546 = vmatprep.subr.mxu0 0.0
        %547 = vmatpush2.msra.mxu0 0.0
        %548 = vmatprep.subr.mxu0 0.0
        %549 = vmatpush2.msra.mxu0 0.0
        %550 = vmatprep.subr.mxu0 0.0
        %551 = vmatpush2.msra.mxu0 0.0
        %552 = vmatprep.mubr.f32.mxu0 0.0
        %553 = vmatmul.mubr.f32.gmra.mxu0 %v388
        %v554 = vpop.f32.mrf.mxu0
        %v555 = vadd.f32 %v367, %v554
        %v556 = vpop.f32.mrf.mxu0
        %v557 = vadd.f32 %v371, %v556
        %558 = vmatprep.mubr.f32.mxu0 0.0
        %559 = vmatmul.mubr.f32.gmra.mxu0 %v391
        %v560 = vpop.f32.mrf.mxu0
        %v561 = vadd.f32 %v367, %v560
        %v562 = vpop.f32.mrf.mxu0
        %v563 = vadd.f32 %v371, %v562
        %564 = vmatprep.mubr.f32.mxu0 0.0
        %565 = vmatmul.mubr.f32.gmra.mxu0 %v394
        %v566 = vpop.f32.mrf.mxu0
        %v567 = vadd.f32 %v367, %v566
        %v568 = vpop.f32.mrf.mxu0
        %v569 = vadd.f32 %v371, %v568
        %570 = vmatprep.mubr.f32.mxu0 0.0
        %571 = vmatmul.mubr.f32.gmra.mxu0 %v397
        %v572 = vpop.f32.mrf.mxu0
        %v573 = vadd.f32 %v367, %v572
        %v574 = vpop.f32.mrf.mxu0
        %v575 = vadd.f32 %v371, %v574
        %576 = vdwg.mxu0
        %577 = vmatprep.subr.mxu0 0.0
        %578 = vmatpush1.msra.mxu0 0.0
        %579 = vmatprep.subr.mxu0 0.0
        %580 = vmatpush1.msra.mxu0 0.0
        %581 = vmatprep.subr.mxu0 0.0
        %582 = vmatpush1.msra.mxu0 0.0
        %583 = vmatprep.subr.mxu0 0.0
        %584 = vmatpush1.msra.mxu0 0.0
        %585 = vmatprep.subr.mxu0 0.0
        %586 = vmatpush1.msra.mxu0 0.0
        %587 = vmatprep.subr.mxu0 0.0
        %588 = vmatpush1.msra.mxu0 0.0
        %589 = vmatprep.subr.mxu0 0.0
        %590 = vmatpush1.msra.mxu0 0.0
        %591 = vmatprep.subr.mxu0 0.0
        %592 = vmatpush1.msra.mxu0 0.0
        %593 = vmatprep.subr.mxu0 0.0
        %594 = vmatpush1.msra.mxu0 0.0
        %595 = vmatprep.subr.mxu0 0.0
        %596 = vmatpush1.msra.mxu0 0.0
        %597 = vmatprep.subr.mxu0 %v353
        %598 = vmatpush1.msra.mxu0 %v352
        %599 = vmatprep.subr.mxu0 %v347
        %600 = vmatpush1.msra.mxu0 %v346
        %601 = vmatprep.subr.mxu0 %v341
        %602 = vmatpush1.msra.mxu0 %v340
        %603 = vmatprep.subr.mxu0 %v335
        %604 = vmatpush1.msra.mxu0 %v334
        %605 = vmatprep.subr.mxu0 %v329
        %606 = vmatpush1.msra.mxu0 %v328
        %607 = vmatprep.subr.mxu0 %v323
        %608 = vmatpush1.msra.mxu0 %v322
        %609 = vmatprep.subr.mxu0 0.0
        %610 = vmatpush2.msra.mxu0 0.0
        %611 = vmatprep.subr.mxu0 0.0
        %612 = vmatpush2.msra.mxu0 0.0
        %613 = vmatprep.subr.mxu0 0.0
        %614 = vmatpush2.msra.mxu0 0.0
        %615 = vmatprep.subr.mxu0 0.0
        %616 = vmatpush2.msra.mxu0 0.0
        %617 = vmatprep.subr.mxu0 0.0
        %618 = vmatpush2.msra.mxu0 0.0
        %619 = vmatprep.subr.mxu0 0.0
        %620 = vmatpush2.msra.mxu0 0.0
        %621 = vmatprep.subr.mxu0 0.0
        %622 = vmatpush2.msra.mxu0 0.0
        %623 = vmatprep.subr.mxu0 0.0
        %624 = vmatpush2.msra.mxu0 0.0
        %625 = vmatprep.subr.mxu0 0.0
        %626 = vmatpush2.msra.mxu0 0.0
        %627 = vmatprep.subr.mxu0 0.0
        %628 = vmatpush2.msra.mxu0 0.0
        %629 = vmatprep.subr.mxu0 0.0
        %630 = vmatpush2.msra.mxu0 0.0
        %631 = vmatprep.subr.mxu0 0.0
        %632 = vmatpush2.msra.mxu0 0.0
        %633 = vmatprep.subr.mxu0 0.0
        %634 = vmatpush2.msra.mxu0 0.0
        %635 = vmatprep.subr.mxu0 0.0
        %636 = vmatpush2.msra.mxu0 0.0
        %637 = vmatprep.subr.mxu0 0.0
        %638 = vmatpush2.msra.mxu0 0.0
        %639 = vmatprep.subr.mxu0 0.0
        %640 = vmatpush2.msra.mxu0 0.0
        %641 = vmatprep.mubr.f32.mxu0 0.0
        %642 = vmatmul.mubr.f32.gmra.mxu0 %v388
        %v643 = vpop.f32.mrf.mxu0
        %v644 = vadd.f32 %v375, %v643
        %v645 = vpop.f32.mrf.mxu0
        %v646 = vadd.f32 %v379, %v645
        %647 = vmatprep.mubr.f32.mxu0 0.0
        %648 = vmatmul.mubr.f32.gmra.mxu0 %v391
        %v649 = vpop.f32.mrf.mxu0
        %v650 = vadd.f32 %v375, %v649
        %v651 = vpop.f32.mrf.mxu0
        %v652 = vadd.f32 %v379, %v651
        %653 = vmatprep.mubr.f32.mxu0 0.0
        %654 = vmatmul.mubr.f32.gmra.mxu0 %v394
        %v655 = vpop.f32.mrf.mxu0
        %v656 = vadd.f32 %v375, %v655
        %v657 = vpop.f32.mrf.mxu0
        %v658 = vadd.f32 %v379, %v657
        %659 = vmatprep.mubr.f32.mxu0 0.0
        %660 = vmatmul.mubr.f32.gmra.mxu0 %v397
        %v661 = vpop.f32.mrf.mxu0
        %v662 = vadd.f32 %v375, %v661
        %v663 = vpop.f32.mrf.mxu0
        %v664 = vadd.f32 %v379, %v663
        %665 = vdwg.mxu0
        %666 = vst [vmem:[#allocation4] sm:$0xff] %v466
        %667 = vst [vmem:[#allocation4 + $0x8] sm:$0xff] %v468
        %668 = vst [vmem:[#allocation4 + $0x10] sm:$0xff] %v555
        %669 = vst [vmem:[#allocation4 + $0x18] sm:$0xff] %v557
        %670 = vst [vmem:[#allocation4 + $0x20] sm:$0xff] %v644
        %671 = vst [vmem:[#allocation4 + $0x28] sm:$0xff] %v646
        %672 = vst [vmem:[#allocation4 + $0x30] sm:$0xff] %v472
        %673 = vst [vmem:[#allocation4 + $0x38] sm:$0xff] %v474
        %674 = vst [vmem:[#allocation4 + $0x40] sm:$0xff] %v561
        %675 = vst [vmem:[#allocation4 + $0x48] sm:$0xff] %v563
        %676 = vst [vmem:[#allocation4 + $0x50] sm:$0xff] %v650
        %677 = vst [vmem:[#allocation4 + $0x58] sm:$0xff] %v652
        %678 = vst [vmem:[#allocation4 + $0x60] sm:$0xff] %v478
        %679 = vst [vmem:[#allocation4 + $0x68] sm:$0xff] %v480
        %680 = vst [vmem:[#allocation4 + $0x70] sm:$0xff] %v567
        %681 = vst [vmem:[#allocation4 + $0x78] sm:$0xff] %v569
        %682 = vst [vmem:[#allocation4 + $0x80] sm:$0xff] %v656
        %683 = vst [vmem:[#allocation4 + $0x88] sm:$0xff] %v658
        %684 = vst [vmem:[#allocation4 + $0x90] sm:$0xff] %v484
        %685 = vst [vmem:[#allocation4 + $0x98] sm:$0xff] %v486
        %686 = vst [vmem:[#allocation4 + $0xa0] sm:$0xff] %v573
        %687 = vst [vmem:[#allocation4 + $0xa8] sm:$0xff] %v575
        %688 = vst [vmem:[#allocation4 + $0xb0] sm:$0xff] %v662
        %689 = vst [vmem:[#allocation4 + $0xb8] sm:$0xff] %v664
        %v690 = vld [vmem:[%s2] sm:$0xff]
        %v691 = vld [vmem:[#allocation8] sm:$0xff]
        %v692 = vld [vmem:[#allocation8 + $0x8] sm:$0xff]
        %v693 = vld [vmem:[#allocation8 + $0x10] sm:$0xff]
        %v694 = vld [vmem:[#allocation8 + $0x18] sm:$0xff]
        %v695 = vld [vmem:[#allocation8 + $0x20] sm:$0xff]
        %v696 = vld [vmem:[#allocation8 + $0x28] sm:$0xff]
        %v697 = vld [vmem:[#allocation8 + $0x30] sm:$0xff]
        %v698 = vld [vmem:[#allocation8 + $0x38] sm:$0xff]
        %v699 = vld [vmem:[#allocation8 + $0x40] sm:$0xff]
        %v700 = vld [vmem:[#allocation8 + $0x48] sm:$0xff]
        %v701 = vld [vmem:[#allocation8 + $0x50] sm:$0xff]
        %v702 = vld [vmem:[#allocation8 + $0x58] sm:$0xff]
        %v703 = vld [vmem:[#allocation8 + $0x60] sm:$0xff]
        %v704 = vld [vmem:[#allocation8 + $0x68] sm:$0xff]
        %v705 = vld [vmem:[#allocation8 + $0x70] sm:$0xff]
        %v706 = vld [vmem:[#allocation8 + $0x78] sm:$0xff]
        %v707 = vld [vmem:[#allocation8 + $0x80] sm:$0xff]
        %v708 = vld [vmem:[#allocation8 + $0x88] sm:$0xff]
        %v709 = vld [vmem:[#allocation8 + $0x90] sm:$0xff]
        %v710 = vld [vmem:[#allocation8 + $0x98] sm:$0xff]
        %v711 = vld [vmem:[#allocation8 + $0xa0] sm:$0xff]
        %v712 = vld [vmem:[#allocation8 + $0xa8] sm:$0xff]
        %v713 = vld [vmem:[#allocation8 + $0xb0] sm:$0xff]
        %v714 = vld [vmem:[#allocation8 + $0xb8] sm:$0xff]
        %v715 = vld [vmem:[#allocation8 + $0xc0] sm:$0xff]
        %v716 = vld [vmem:[#allocation8 + $0xc8] sm:$0xff]
        %v717 = vld [vmem:[#allocation8 + $0xd0] sm:$0xff]
        %v718 = vld [vmem:[#allocation8 + $0xd8] sm:$0xff]
        %v719 = vld [vmem:[#allocation8 + $0xe0] sm:$0xff]
        %v720 = vld [vmem:[#allocation8 + $0xe8] sm:$0xff]
        %v721 = vld [vmem:[#allocation8 + $0xf0] sm:$0xff]
        %v722 = vld [vmem:[#allocation8 + $0xf8] sm:$0xff]
        %v723 = vld [vmem:[#allocation8 + $0x100] sm:$0xff]
        %v724 = vld [vmem:[#allocation8 + $0x108] sm:$0xff]
        %v725 = vld [vmem:[#allocation8 + $0x110] sm:$0xff]
        %v726 = vld [vmem:[#allocation8 + $0x118] sm:$0xff]
        %v727 = vld [vmem:[#allocation8 + $0x120] sm:$0xff]
        %v728 = vld [vmem:[#allocation8 + $0x128] sm:$0xff]
        %v729 = vld [vmem:[#allocation8 + $0x130] sm:$0xff]
        %v730 = vld [vmem:[#allocation8 + $0x138] sm:$0xff]
        %v731 = vld [vmem:[#allocation8 + $0x140] sm:$0xff]
        %v732 = vld [vmem:[#allocation8 + $0x148] sm:$0xff]
        %v733 = vld [vmem:[#allocation8 + $0x150] sm:$0xff]
        %v734 = vld [vmem:[#allocation8 + $0x158] sm:$0xff]
        %v735 = vld [vmem:[#allocation8 + $0x160] sm:$0xff]
        %v736 = vld [vmem:[#allocation8 + $0x168] sm:$0xff]
        %v737 = vld [vmem:[#allocation8 + $0x170] sm:$0xff]
        %v738 = vld [vmem:[#allocation8 + $0x178] sm:$0xff]
        %v739 = vld [vmem:[#allocation8 + $0x180] sm:$0xff]
        %v740 = vld [vmem:[#allocation8 + $0x188] sm:$0xff]
        %v741 = vld [vmem:[#allocation8 + $0x190] sm:$0xff]
        %v742 = vld [vmem:[#allocation8 + $0x198] sm:$0xff]
        %v743 = vld [vmem:[#allocation8 + $0x1a0] sm:$0xff]
        %v744 = vld [vmem:[#allocation8 + $0x1a8] sm:$0xff]
        %v745 = vld [vmem:[#allocation8 + $0x1b0] sm:$0xff]
        %v746 = vld [vmem:[#allocation8 + $0x1b8] sm:$0xff]
        %v747 = vld [vmem:[#allocation8 + $0x1c0] sm:$0xff]
        %v748 = vld [vmem:[#allocation8 + $0x1c8] sm:$0xff]
        %v749 = vld [vmem:[#allocation8 + $0x1d0] sm:$0xff]
        %v750 = vld [vmem:[#allocation8 + $0x1d8] sm:$0xff]
        %v751 = vld [vmem:[#allocation8 + $0x1e0] sm:$0xff]
        %v752 = vld [vmem:[#allocation8 + $0x1e8] sm:$0xff]
        %v753 = vld [vmem:[#allocation8 + $0x1f0] sm:$0xff]
        %v754 = vld [vmem:[#allocation8 + $0x1f8] sm:$0xff]
        %v755 = vld [vmem:[#allocation8 + $0x200] sm:$0xff]
        %v756 = vld [vmem:[#allocation8 + $0x208] sm:$0xff]
        %v757 = vld [vmem:[#allocation8 + $0x210] sm:$0xff]
        %v758 = vld [vmem:[#allocation8 + $0x218] sm:$0xff]
        %v759 = vld [vmem:[#allocation8 + $0x220] sm:$0xff]
        %v760 = vld [vmem:[#allocation8 + $0x228] sm:$0xff]
        %v761 = vld [vmem:[#allocation8 + $0x230] sm:$0xff]
        %v762 = vld [vmem:[#allocation8 + $0x238] sm:$0xff]
        %v763 = vld [vmem:[#allocation8 + $0x240] sm:$0xff]
        %v764 = vld [vmem:[#allocation8 + $0x248] sm:$0xff]
        %v765 = vld [vmem:[#allocation8 + $0x250] sm:$0xff]
        %v766 = vld [vmem:[#allocation8 + $0x258] sm:$0xff]
        %v767 = vld [vmem:[#allocation8 + $0x260] sm:$0xff]
        %v768 = vld [vmem:[#allocation8 + $0x268] sm:$0xff]
        %v769 = vld [vmem:[#allocation8 + $0x270] sm:$0xff]
        %v770 = vld [vmem:[#allocation8 + $0x278] sm:$0xff]
        %v771 = vld [vmem:[#allocation2] sm:$0xff]
        %v772 = vld [vmem:[#allocation3] sm:$0xff]
        %s773 = smul.u32 0, 6
        %s774 = smul.addr %s773, 8
        %s775 = scalar_lea.vmem [#allocation4], %s774
        %v776 = vld [vmem:[%s775] sm:$0xff]
        %v777 = vld [vmem:[%s775 + $0x8] sm:$0xff]
        %v778 = vld [vmem:[%s775 + $0x10] sm:$0xff]
        %v779 = vld [vmem:[%s775 + $0x18] sm:$0xff]
        %v780 = vld [vmem:[%s775 + $0x20] sm:$0xff]
        %v781 = vld [vmem:[%s775 + $0x28] sm:$0xff]
        %v782 = vld [vmem:[%s304] sm:$0xff]
        %783 = vmatprep.subr.mxu0 %v767
        %784 = vmatpush1.msra.mxu0 %v766
        %785 = vmatprep.subr.mxu0 %v762
        %786 = vmatpush1.msra.mxu0 %v761
        %787 = vmatprep.subr.mxu0 %v757
        %788 = vmatpush1.msra.mxu0 %v756
        %789 = vmatprep.subr.mxu0 %v752
        %790 = vmatpush1.msra.mxu0 %v751
        %791 = vmatprep.subr.mxu0 %v747
        %792 = vmatpush1.msra.mxu0 %v746
        %793 = vmatprep.subr.mxu0 %v742
        %794 = vmatpush1.msra.mxu0 %v741
        %795 = vmatprep.subr.mxu0 %v737
        %796 = vmatpush1.msra.mxu0 %v736
        %797 = vmatprep.subr.mxu0 %v732
        %798 = vmatpush1.msra.mxu0 %v731
        %799 = vmatprep.subr.mxu0 %v727
        %800 = vmatpush1.msra.mxu0 %v726
        %801 = vmatprep.subr.mxu0 %v722
        %802 = vmatpush1.msra.mxu0 %v721
        %803 = vmatprep.subr.mxu0 %v717
        %804 = vmatpush1.msra.mxu0 %v716
        %805 = vmatprep.subr.mxu0 %v712
        %806 = vmatpush1.msra.mxu0 %v711
        %807 = vmatprep.subr.mxu0 %v707
        %808 = vmatpush1.msra.mxu0 %v706
        %809 = vmatprep.subr.mxu0 %v702
        %810 = vmatpush1.msra.mxu0 %v701
        %811 = vmatprep.subr.mxu0 %v697
        %812 = vmatpush1.msra.mxu0 %v696
        %813 = vmatprep.subr.mxu0 %v692
        %814 = vmatpush1.msra.mxu0 %v691
        %815 = vmatprep.subr.mxu0 0.0
        %816 = vmatpush2.msra.mxu0 0.0
        %817 = vmatprep.subr.mxu0 0.0
        %818 = vmatpush2.msra.mxu0 0.0
        %819 = vmatprep.subr.mxu0 0.0
        %820 = vmatpush2.msra.mxu0 0.0
        %821 = vmatprep.subr.mxu0 0.0
        %822 = vmatpush2.msra.mxu0 0.0
        %823 = vmatprep.subr.mxu0 0.0
        %824 = vmatpush2.msra.mxu0 0.0
        %825 = vmatprep.subr.mxu0 0.0
        %826 = vmatpush2.msra.mxu0 0.0
        %827 = vmatprep.subr.mxu0 0.0
        %828 = vmatpush2.msra.mxu0 0.0
        %829 = vmatprep.subr.mxu0 0.0
        %830 = vmatpush2.msra.mxu0 0.0
        %831 = vmatprep.subr.mxu0 0.0
        %832 = vmatpush2.msra.mxu0 0.0
        %833 = vmatprep.subr.mxu0 0.0
        %834 = vmatpush2.msra.mxu0 0.0
        %835 = vmatprep.subr.mxu0 0.0
        %836 = vmatpush2.msra.mxu0 0.0
        %837 = vmatprep.subr.mxu0 0.0
        %838 = vmatpush2.msra.mxu0 0.0
        %839 = vmatprep.subr.mxu0 0.0
        %840 = vmatpush2.msra.mxu0 0.0
        %841 = vmatprep.subr.mxu0 0.0
        %842 = vmatpush2.msra.mxu0 0.0
        %843 = vmatprep.subr.mxu0 0.0
        %844 = vmatpush2.msra.mxu0 0.0
        %845 = vmatprep.subr.mxu0 0.0
        %846 = vmatpush2.msra.mxu0 0.0
        %847 = vmatprep.mubr.f32.mxu0 0.0
        %848 = vmatmul.mubr.f32.gmra.mxu0 %v771
        %v849 = vpop.f32.mrf.mxu0
        %v850 = vadd.f32 0.0, %v849
        %v851 = vpop.f32.mrf.mxu0
        %v852 = vadd.f32 0.0, %v851
        %853 = vdwg.mxu0
        %854 = vmatprep.subr.mxu0 %v769
        %855 = vmatpush1.msra.mxu0 %v768
        %856 = vmatprep.subr.mxu0 %v764
        %857 = vmatpush1.msra.mxu0 %v763
        %858 = vmatprep.subr.mxu0 %v759
        %859 = vmatpush1.msra.mxu0 %v758
        %860 = vmatprep.subr.mxu0 %v754
        %861 = vmatpush1.msra.mxu0 %v753
        %862 = vmatprep.subr.mxu0 %v749
        %863 = vmatpush1.msra.mxu0 %v748
        %864 = vmatprep.subr.mxu0 %v744
        %865 = vmatpush1.msra.mxu0 %v743
        %866 = vmatprep.subr.mxu0 %v739
        %867 = vmatpush1.msra.mxu0 %v738
        %868 = vmatprep.subr.mxu0 %v734
        %869 = vmatpush1.msra.mxu0 %v733
        %870 = vmatprep.subr.mxu0 %v729
        %871 = vmatpush1.msra.mxu0 %v728
        %872 = vmatprep.subr.mxu0 %v724
        %873 = vmatpush1.msra.mxu0 %v723
        %874 = vmatprep.subr.mxu0 %v719
        %875 = vmatpush1.msra.mxu0 %v718
        %876 = vmatprep.subr.mxu0 %v714
        %877 = vmatpush1.msra.mxu0 %v713
        %878 = vmatprep.subr.mxu0 %v709
        %879 = vmatpush1.msra.mxu0 %v708
        %880 = vmatprep.subr.mxu0 %v704
        %881 = vmatpush1.msra.mxu0 %v703
        %882 = vmatprep.subr.mxu0 %v699
        %883 = vmatpush1.msra.mxu0 %v698
        %884 = vmatprep.subr.mxu0 %v694
        %885 = vmatpush1.msra.mxu0 %v693
        %886 = vmatprep.subr.mxu0 0.0
        %887 = vmatpush2.msra.mxu0 0.0
        %888 = vmatprep.subr.mxu0 0.0
        %889 = vmatpush2.msra.mxu0 0.0
        %890 = vmatprep.subr.mxu0 0.0
        %891 = vmatpush2.msra.mxu0 0.0
        %892 = vmatprep.subr.mxu0 0.0
        %893 = vmatpush2.msra.mxu0 0.0
        %894 = vmatprep.subr.mxu0 0.0
        %895 = vmatpush2.msra.mxu0 0.0
        %896 = vmatprep.subr.mxu0 0.0
        %897 = vmatpush2.msra.mxu0 0.0
        %898 = vmatprep.subr.mxu0 0.0
        %899 = vmatpush2.msra.mxu0 0.0
        %900 = vmatprep.subr.mxu0 0.0
        %901 = vmatpush2.msra.mxu0 0.0
        %902 = vmatprep.subr.mxu0 0.0
        %903 = vmatpush2.msra.mxu0 0.0
        %904 = vmatprep.subr.mxu0 0.0
        %905 = vmatpush2.msra.mxu0 0.0
        %906 = vmatprep.subr.mxu0 0.0
        %907 = vmatpush2.msra.mxu0 0.0
        %908 = vmatprep.subr.mxu0 0.0
        %909 = vmatpush2.msra.mxu0 0.0
        %910 = vmatprep.subr.mxu0 0.0
        %911 = vmatpush2.msra.mxu0 0.0
        %912 = vmatprep.subr.mxu0 0.0
        %913 = vmatpush2.msra.mxu0 0.0
        %914 = vmatprep.subr.mxu0 0.0
        %915 = vmatpush2.msra.mxu0 0.0
        %916 = vmatprep.subr.mxu0 0.0
        %917 = vmatpush2.msra.mxu0 0.0
        %918 = vmatprep.mubr.f32.mxu0 0.0
        %919 = vmatmul.mubr.f32.gmra.mxu0 %v771
        %v920 = vpop.f32.mrf.mxu0
        %v921 = vadd.f32 0.0, %v920
        %v922 = vpop.f32.mrf.mxu0
        %v923 = vadd.f32 0.0, %v922
        %924 = vdwg.mxu0
        %925 = vmatprep.subr.mxu0 0.0
        %926 = vmatpush1.msra.mxu0 %v770
        %927 = vmatprep.subr.mxu0 0.0
        %928 = vmatpush1.msra.mxu0 %v765
        %929 = vmatprep.subr.mxu0 0.0
        %930 = vmatpush1.msra.mxu0 %v760
        %931 = vmatprep.subr.mxu0 0.0
        %932 = vmatpush1.msra.mxu0 %v755
        %933 = vmatprep.subr.mxu0 0.0
        %934 = vmatpush1.msra.mxu0 %v750
        %935 = vmatprep.subr.mxu0 0.0
        %936 = vmatpush1.msra.mxu0 %v745
        %937 = vmatprep.subr.mxu0 0.0
        %938 = vmatpush1.msra.mxu0 %v740
        %939 = vmatprep.subr.mxu0 0.0
        %940 = vmatpush1.msra.mxu0 %v735
        %941 = vmatprep.subr.mxu0 0.0
        %942 = vmatpush1.msra.mxu0 %v730
        %943 = vmatprep.subr.mxu0 0.0
        %944 = vmatpush1.msra.mxu0 %v725
        %945 = vmatprep.subr.mxu0 0.0
        %946 = vmatpush1.msra.mxu0 %v720
        %947 = vmatprep.subr.mxu0 0.0
        %948 = vmatpush1.msra.mxu0 %v715
        %949 = vmatprep.subr.mxu0 0.0
        %950 = vmatpush1.msra.mxu0 %v710
        %951 = vmatprep.subr.mxu0 0.0
        %952 = vmatpush1.msra.mxu0 %v705
        %953 = vmatprep.subr.mxu0 0.0
        %954 = vmatpush1.msra.mxu0 %v700
        %955 = vmatprep.subr.mxu0 0.0
        %956 = vmatpush1.msra.mxu0 %v695
        %957 = vmatprep.subr.mxu0 0.0
        %958 = vmatpush2.msra.mxu0 0.0
        %959 = vmatprep.subr.mxu0 0.0
        %960 = vmatpush2.msra.mxu0 0.0
        %961 = vmatprep.subr.mxu0 0.0
        %962 = vmatpush2.msra.mxu0 0.0
        %963 = vmatprep.subr.mxu0 0.0
        %964 = vmatpush2.msra.mxu0 0.0
        %965 = vmatprep.subr.mxu0 0.0
        %966 = vmatpush2.msra.mxu0 0.0
        %967 = vmatprep.subr.mxu0 0.0
        %968 = vmatpush2.msra.mxu0 0.0
        %969 = vmatprep.subr.mxu0 0.0
        %970 = vmatpush2.msra.mxu0 0.0
        %971 = vmatprep.subr.mxu0 0.0
        %972 = vmatpush2.msra.mxu0 0.0
        %973 = vmatprep.subr.mxu0 0.0
        %974 = vmatpush2.msra.mxu0 0.0
        %975 = vmatprep.subr.mxu0 0.0
        %976 = vmatpush2.msra.mxu0 0.0
        %977 = vmatprep.subr.mxu0 0.0
        %978 = vmatpush2.msra.mxu0 0.0
        %979 = vmatprep.subr.mxu0 0.0
        %980 = vmatpush2.msra.mxu0 0.0
        %981 = vmatprep.subr.mxu0 0.0
        %982 = vmatpush2.msra.mxu0 0.0
        %983 = vmatprep.subr.mxu0 0.0
        %984 = vmatpush2.msra.mxu0 0.0
        %985 = vmatprep.subr.mxu0 0.0
        %986 = vmatpush2.msra.mxu0 0.0
        %987 = vmatprep.subr.mxu0 0.0
        %988 = vmatpush2.msra.mxu0 0.0
        %989 = vmatprep.mubr.f32.mxu0 0.0
        %990 = vmatmul.mubr.f32.gmra.mxu0 %v771
        %v991 = vpop.f32.mrf.mxu0
        %v992 = vadd.f32 0.0, %v991
        %v993 = vpop.f32.mrf.mxu0
        %994 = vdwg.mxu0
        %v995 = vadd.f32 %v776, %v850
        %v996 = vadd.f32 %v777, %v852
        %v997 = vadd.f32 %v778, %v921
        %v998 = vadd.f32 %v779, %v923
        %v999 = vadd.f32 %v780, %v992
        %v1000 = vxor.u32 %v995, 2147483648
        %v1001 = vmul.f32 %v1000, 1.442695
        %v1002 = vpow.pop %v1001
        %v1003 = vadd.f32 %v1002, 1.0
        %v1004 = vrcp.pop %v1003
        %v1005 = vmul.f32 1.0, %v1004
        %v1006 = vxor.u32 %v996, 2147483648
        %v1007 = vmul.f32 %v1006, 1.442695
        %v1008 = vpow.pop %v1007
        %v1009 = vadd.f32 %v1008, 1.0
        %v1010 = vrcp.pop %v1009
        %v1011 = vmul.f32 1.0, %v1010
        %v1012 = vtanh.pop %v997
        %v1013 = vxor.u32 %v998, 2147483648
        %v1014 = vmul.f32 %v1013, 1.442695
        %v1015 = vpow.pop %v1014
        %v1016 = vadd.f32 %v1015, 1.0
        %v1017 = vrcp.pop %v1016
        %v1018 = vmul.f32 1.0, %v1017
        %v1019 = vxor.u32 %v999, 2147483648
        %v1020 = vmul.f32 %v1019, 1.442695
        %v1021 = vpow.pop %v1020
        %v1022 = vadd.f32 %v1021, 1.0
        %v1023 = vrcp.pop %v1022
        %v1024 = vmul.f32 1.0, %v1023
        %v1025 = vmul.f32 %v1011, %v772
        %v1026 = vmul.f32 %v1005, %v1012
        %v1027 = vadd.f32 %v1025, %v1026
        %v1028 = vtanh.pop %v1027
        %v1029 = vmul.f32 %v1018, %v1028
        %v1030 = vmul.f32 %v1024, %v1029
        %v1031 = vsub.f32 1.0, %v1024
        %v1032 = vmul.f32 %v1031, %v781
        %v1033 = vadd.f32 %v1030, %v1032
        %v1034 = vmul.f32 %v690, %v1033
        %1036 = vset.pattern.permute.xlu0 0
        %1037 = vperm.xlu0 %1036, %v782
        %v1038 = vpop.permute.xlu0 %1037
        %v1040 = vmul.f32 %v1038, %v1034
        %v1041 = vsub.f32 1.0, %v782
        %1043 = vset.pattern.permute.xlu0 0
        %1044 = vperm.xlu0 %1043, %v1041
        %v1045 = vpop.permute.xlu0 %1044
        %v1047 = vmul.f32 %v1045, %v771
        %v1048 = vadd.f32 %v1040, %v1047
        %v1049 = vmul.f32 %v1038, %v1027
        %v1050 = vmul.f32 %v1045, %v772
        %v1051 = vadd.f32 %v1049, %v1050
        %s1052 = scalar_lea.vmem %s293, 24 [#allocation10]
        %1053 = vst [vmem:[%s1052] sm:$0xff] %v1048
        %s1054 = smul.u32 1, 6
        %s1055 = smul.addr %s1054, 8
        %s1056 = scalar_lea.vmem [#allocation4], %s1055
        %v1057 = vld [vmem:[%s1056] sm:$0xff]
        %v1058 = vld [vmem:[%s1056 + $0x8] sm:$0xff]
        %v1059 = vld [vmem:[%s1056 + $0x10] sm:$0xff]
        %v1060 = vld [vmem:[%s1056 + $0x18] sm:$0xff]
        %v1061 = vld [vmem:[%s1056 + $0x20] sm:$0xff]
        %v1062 = vld [vmem:[%s1056 + $0x28] sm:$0xff]
        %s1063 = scalar_lea.vmem %s304, 8
        %v1064 = vld [vmem:[%s1063] sm:$0xff]
        %1065 = vmatprep.subr.mxu0 %v767
        %1066 = vmatpush1.msra.mxu0 %v766
        %1067 = vmatprep.subr.mxu0 %v762
        %1068 = vmatpush1.msra.mxu0 %v761
        %1069 = vmatprep.subr.mxu0 %v757
        %1070 = vmatpush1.msra.mxu0 %v756
        %1071 = vmatprep.subr.mxu0 %v752
        %1072 = vmatpush1.msra.mxu0 %v751
        %1073 = vmatprep.subr.mxu0 %v747
        %1074 = vmatpush1.msra.mxu0 %v746
        %1075 = vmatprep.subr.mxu0 %v742
        %1076 = vmatpush1.msra.mxu0 %v741
        %1077 = vmatprep.subr.mxu0 %v737
        %1078 = vmatpush1.msra.mxu0 %v736
        %1079 = vmatprep.subr.mxu0 %v732
        %1080 = vmatpush1.msra.mxu0 %v731
        %1081 = vmatprep.subr.mxu0 %v727
        %1082 = vmatpush1.msra.mxu0 %v726
        %1083 = vmatprep.subr.mxu0 %v722
        %1084 = vmatpush1.msra.mxu0 %v721
        %1085 = vmatprep.subr.mxu0 %v717
        %1086 = vmatpush1.msra.mxu0 %v716
        %1087 = vmatprep.subr.mxu0 %v712
        %1088 = vmatpush1.msra.mxu0 %v711
        %1089 = vmatprep.subr.mxu0 %v707
        %1090 = vmatpush1.msra.mxu0 %v706
        %1091 = vmatprep.subr.mxu0 %v702
        %1092 = vmatpush1.msra.mxu0 %v701
        %1093 = vmatprep.subr.mxu0 %v697
        %1094 = vmatpush1.msra.mxu0 %v696
        %1095 = vmatprep.subr.mxu0 %v692
        %1096 = vmatpush1.msra.mxu0 %v691
        %1097 = vmatprep.subr.mxu0 0.0
        %1098 = vmatpush2.msra.mxu0 0.0
        %1099 = vmatprep.subr.mxu0 0.0
        %1100 = vmatpush2.msra.mxu0 0.0
        %1101 = vmatprep.subr.mxu0 0.0
        %1102 = vmatpush2.msra.mxu0 0.0
        %1103 = vmatprep.subr.mxu0 0.0
        %1104 = vmatpush2.msra.mxu0 0.0
        %1105 = vmatprep.subr.mxu0 0.0
        %1106 = vmatpush2.msra.mxu0 0.0
        %1107 = vmatprep.subr.mxu0 0.0
        %1108 = vmatpush2.msra.mxu0 0.0
        %1109 = vmatprep.subr.mxu0 0.0
        %1110 = vmatpush2.msra.mxu0 0.0
        %1111 = vmatprep.subr.mxu0 0.0
        %1112 = vmatpush2.msra.mxu0 0.0
        %1113 = vmatprep.subr.mxu0 0.0
        %1114 = vmatpush2.msra.mxu0 0.0
        %1115 = vmatprep.subr.mxu0 0.0
        %1116 = vmatpush2.msra.mxu0 0.0
        %1117 = vmatprep.subr.mxu0 0.0
        %1118 = vmatpush2.msra.mxu0 0.0
        %1119 = vmatprep.subr.mxu0 0.0
        %1120 = vmatpush2.msra.mxu0 0.0
        %1121 = vmatprep.subr.mxu0 0.0
        %1122 = vmatpush2.msra.mxu0 0.0
        %1123 = vmatprep.subr.mxu0 0.0
        %1124 = vmatpush2.msra.mxu0 0.0
        %1125 = vmatprep.subr.mxu0 0.0
        %1126 = vmatpush2.msra.mxu0 0.0
        %1127 = vmatprep.subr.mxu0 0.0
        %1128 = vmatpush2.msra.mxu0 0.0
        %1129 = vmatprep.mubr.f32.mxu0 0.0
        %1130 = vmatmul.mubr.f32.gmra.mxu0 %v1048
        %v1131 = vpop.f32.mrf.mxu0
        %v1132 = vadd.f32 0.0, %v1131
        %v1133 = vpop.f32.mrf.mxu0
        %v1134 = vadd.f32 0.0, %v1133
        %1135 = vdwg.mxu0
        %1136 = vmatprep.subr.mxu0 %v769
        %1137 = vmatpush1.msra.mxu0 %v768
        %1138 = vmatprep.subr.mxu0 %v764
        %1139 = vmatpush1.msra.mxu0 %v763
        %1140 = vmatprep.subr.mxu0 %v759
        %1141 = vmatpush1.msra.mxu0 %v758
        %1142 = vmatprep.subr.mxu0 %v754
        %1143 = vmatpush1.msra.mxu0 %v753
        %1144 = vmatprep.subr.mxu0 %v749
        %1145 = vmatpush1.msra.mxu0 %v748
        %1146 = vmatprep.subr.mxu0 %v744
        %1147 = vmatpush1.msra.mxu0 %v743
        %1148 = vmatprep.subr.mxu0 %v739
        %1149 = vmatpush1.msra.mxu0 %v738
        %1150 = vmatprep.subr.mxu0 %v734
        %1151 = vmatpush1.msra.mxu0 %v733
        %1152 = vmatprep.subr.mxu0 %v729
        %1153 = vmatpush1.msra.mxu0 %v728
        %1154 = vmatprep.subr.mxu0 %v724
        %1155 = vmatpush1.msra.mxu0 %v723
        %1156 = vmatprep.subr.mxu0 %v719
        %1157 = vmatpush1.msra.mxu0 %v718
        %1158 = vmatprep.subr.mxu0 %v714
        %1159 = vmatpush1.msra.mxu0 %v713
        %1160 = vmatprep.subr.mxu0 %v709
        %1161 = vmatpush1.msra.mxu0 %v708
        %1162 = vmatprep.subr.mxu0 %v704
        %1163 = vmatpush1.msra.mxu0 %v703
        %1164 = vmatprep.subr.mxu0 %v699
        %1165 = vmatpush1.msra.mxu0 %v698
        %1166 = vmatprep.subr.mxu0 %v694
        %1167 = vmatpush1.msra.mxu0 %v693
        %1168 = vmatprep.subr.mxu0 0.0
        %1169 = vmatpush2.msra.mxu0 0.0
        %1170 = vmatprep.subr.mxu0 0.0
        %1171 = vmatpush2.msra.mxu0 0.0
        %1172 = vmatprep.subr.mxu0 0.0
        %1173 = vmatpush2.msra.mxu0 0.0
        %1174 = vmatprep.subr.mxu0 0.0
        %1175 = vmatpush2.msra.mxu0 0.0
        %1176 = vmatprep.subr.mxu0 0.0
        %1177 = vmatpush2.msra.mxu0 0.0
        %1178 = vmatprep.subr.mxu0 0.0
        %1179 = vmatpush2.msra.mxu0 0.0
        %1180 = vmatprep.subr.mxu0 0.0
        %1181 = vmatpush2.msra.mxu0 0.0
        %1182 = vmatprep.subr.mxu0 0.0
        %1183 = vmatpush2.msra.mxu0 0.0
        %1184 = vmatprep.subr.mxu0 0.0
        %1185 = vmatpush2.msra.mxu0 0.0
        %1186 = vmatprep.subr.mxu0 0.0
        %1187 = vmatpush2.msra.mxu0 0.0
        %1188 = vmatprep.subr.mxu0 0.0
        %1189 = vmatpush2.msra.mxu0 0.0
        %1190 = vmatprep.subr.mxu0 0.0
        %1191 = vmatpush2.msra.mxu0 0.0
        %1192 = vmatprep.subr.mxu0 0.0
        %1193 = vmatpush2.msra.mxu0 0.0
        %1194 = vmatprep.subr.mxu0 0.0
        %1195 = vmatpush2.msra.mxu0 0.0
        %1196 = vmatprep.subr.mxu0 0.0
        %1197 = vmatpush2.msra.mxu0 0.0
        %1198 = vmatprep.subr.mxu0 0.0
        %1199 = vmatpush2.msra.mxu0 0.0
        %1200 = vmatprep.mubr.f32.mxu0 0.0
        %1201 = vmatmul.mubr.f32.gmra.mxu0 %v1048
        %v1202 = vpop.f32.mrf.mxu0
        %v1203 = vadd.f32 0.0, %v1202
        %v1204 = vpop.f32.mrf.mxu0
        %v1205 = vadd.f32 0.0, %v1204
        %1206 = vdwg.mxu0
        %1207 = vmatprep.subr.mxu0 0.0
        %1208 = vmatpush1.msra.mxu0 %v770
        %1209 = vmatprep.subr.mxu0 0.0
        %1210 = vmatpush1.msra.mxu0 %v765
        %1211 = vmatprep.subr.mxu0 0.0
        %1212 = vmatpush1.msra.mxu0 %v760
        %1213 = vmatprep.subr.mxu0 0.0
        %1214 = vmatpush1.msra.mxu0 %v755
        %1215 = vmatprep.subr.mxu0 0.0
        %1216 = vmatpush1.msra.mxu0 %v750
        %1217 = vmatprep.subr.mxu0 0.0
        %1218 = vmatpush1.msra.mxu0 %v745
        %1219 = vmatprep.subr.mxu0 0.0
        %1220 = vmatpush1.msra.mxu0 %v740
        %1221 = vmatprep.subr.mxu0 0.0
        %1222 = vmatpush1.msra.mxu0 %v735
        %1223 = vmatprep.subr.mxu0 0.0
        %1224 = vmatpush1.msra.mxu0 %v730
        %1225 = vmatprep.subr.mxu0 0.0
        %1226 = vmatpush1.msra.mxu0 %v725
        %1227 = vmatprep.subr.mxu0 0.0
        %1228 = vmatpush1.msra.mxu0 %v720
        %1229 = vmatprep.subr.mxu0 0.0
        %1230 = vmatpush1.msra.mxu0 %v715
        %1231 = vmatprep.subr.mxu0 0.0
        %1232 = vmatpush1.msra.mxu0 %v710
        %1233 = vmatprep.subr.mxu0 0.0
        %1234 = vmatpush1.msra.mxu0 %v705
        %1235 = vmatprep.subr.mxu0 0.0
        %1236 = vmatpush1.msra.mxu0 %v700
        %1237 = vmatprep.subr.mxu0 0.0
        %1238 = vmatpush1.msra.mxu0 %v695
        %1239 = vmatprep.subr.mxu0 0.0
        %1240 = vmatpush2.msra.mxu0 0.0
        %1241 = vmatprep.subr.mxu0 0.0
        %1242 = vmatpush2.msra.mxu0 0.0
        %1243 = vmatprep.subr.mxu0 0.0
        %1244 = vmatpush2.msra.mxu0 0.0
        %1245 = vmatprep.subr.mxu0 0.0
        %1246 = vmatpush2.msra.mxu0 0.0
        %1247 = vmatprep.subr.mxu0 0.0
        %1248 = vmatpush2.msra.mxu0 0.0
        %1249 = vmatprep.subr.mxu0 0.0
        %1250 = vmatpush2.msra.mxu0 0.0
        %1251 = vmatprep.subr.mxu0 0.0
        %1252 = vmatpush2.msra.mxu0 0.0
        %1253 = vmatprep.subr.mxu0 0.0
        %1254 = vmatpush2.msra.mxu0 0.0
        %1255 = vmatprep.subr.mxu0 0.0
        %1256 = vmatpush2.msra.mxu0 0.0
        %1257 = vmatprep.subr.mxu0 0.0
        %1258 = vmatpush2.msra.mxu0 0.0
        %1259 = vmatprep.subr.mxu0 0.0
        %1260 = vmatpush2.msra.mxu0 0.0
        %1261 = vmatprep.subr.mxu0 0.0
        %1262 = vmatpush2.msra.mxu0 0.0
        %1263 = vmatprep.subr.mxu0 0.0
        %1264 = vmatpush2.msra.mxu0 0.0
        %1265 = vmatprep.subr.mxu0 0.0
        %1266 = vmatpush2.msra.mxu0 0.0
        %1267 = vmatprep.subr.mxu0 0.0
        %1268 = vmatpush2.msra.mxu0 0.0
        %1269 = vmatprep.subr.mxu0 0.0
        %1270 = vmatpush2.msra.mxu0 0.0
        %1271 = vmatprep.mubr.f32.mxu0 0.0
        %1272 = vmatmul.mubr.f32.gmra.mxu0 %v1048
        %v1273 = vpop.f32.mrf.mxu0
        %v1274 = vadd.f32 0.0, %v1273
        %v1275 = vpop.f32.mrf.mxu0
        %1276 = vdwg.mxu0
        %v1277 = vadd.f32 %v1057, %v1132
        %v1278 = vadd.f32 %v1058, %v1134
        %v1279 = vadd.f32 %v1059, %v1203
        %v1280 = vadd.f32 %v1060, %v1205
        %v1281 = vadd.f32 %v1061, %v1274
        %v1282 = vxor.u32 %v1277, 2147483648
        %v1283 = vmul.f32 %v1282, 1.442695
        %v1284 = vpow.pop %v1283
        %v1285 = vadd.f32 %v1284, 1.0
        %v1286 = vrcp.pop %v1285
        %v1287 = vmul.f32 1.0, %v1286
        %v1288 = vxor.u32 %v1278, 2147483648
        %v1289 = vmul.f32 %v1288, 1.442695
        %v1290 = vpow.pop %v1289
        %v1291 = vadd.f32 %v1290, 1.0
        %v1292 = vrcp.pop %v1291
        %v1293 = vmul.f32 1.0, %v1292
        %v1294 = vtanh.pop %v1279
        %v1295 = vxor.u32 %v1280, 2147483648
        %v1296 = vmul.f32 %v1295, 1.442695
        %v1297 = vpow.pop %v1296
        %v1298 = vadd.f32 %v1297, 1.0
        %v1299 = vrcp.pop %v1298
        %v1300 = vmul.f32 1.0, %v1299
        %v1301 = vxor.u32 %v1281, 2147483648
        %v1302 = vmul.f32 %v1301, 1.442695
        %v1303 = vpow.pop %v1302
        %v1304 = vadd.f32 %v1303, 1.0
        %v1305 = vrcp.pop %v1304
        %v1306 = vmul.f32 1.0, %v1305
        %v1307 = vmul.f32 %v1293, %v1051
        %v1308 = vmul.f32 %v1287, %v1294
        %v1309 = vadd.f32 %v1307, %v1308
        %v1310 = vtanh.pop %v1309
        %v1311 = vmul.f32 %v1300, %v1310
        %v1312 = vmul.f32 %v1306, %v1311
        %v1313 = vsub.f32 1.0, %v1306
        %v1314 = vmul.f32 %v1313, %v1062
        %v1315 = vadd.f32 %v1312, %v1314
        %v1316 = vmul.f32 %v690, %v1315
        %1318 = vset.pattern.permute.xlu0 0
        %1319 = vperm.xlu0 %1318, %v1064
        %v1320 = vpop.permute.xlu0 %1319
        %v1322 = vmul.f32 %v1320, %v1316
        %v1323 = vsub.f32 1.0, %v1064
        %1325 = vset.pattern.permute.xlu0 0
        %1326 = vperm.xlu0 %1325, %v1323
        %v1327 = vpop.permute.xlu0 %1326
        %v1329 = vmul.f32 %v1327, %v1048
        %v1330 = vadd.f32 %v1322, %v1329
        %v1331 = vmul.f32 %v1320, %v1309
        %v1332 = vmul.f32 %v1327, %v1051
        %v1333 = vadd.f32 %v1331, %v1332
        %s1334 = scalar_lea.vmem %s293, 16 [#allocation10]
        %1335 = vst [vmem:[%s1334] sm:$0xff] %v1330
        %s1336 = smul.u32 2, 6
        %s1337 = smul.addr %s1336, 8
        %s1338 = scalar_lea.vmem [#allocation4], %s1337
        %v1339 = vld [vmem:[%s1338] sm:$0xff]
        %v1340 = vld [vmem:[%s1338 + $0x8] sm:$0xff]
        %v1341 = vld [vmem:[%s1338 + $0x10] sm:$0xff]
        %v1342 = vld [vmem:[%s1338 + $0x18] sm:$0xff]
        %v1343 = vld [vmem:[%s1338 + $0x20] sm:$0xff]
        %v1344 = vld [vmem:[%s1338 + $0x28] sm:$0xff]
        %s1345 = scalar_lea.vmem %s304, 16
        %v1346 = vld [vmem:[%s1345] sm:$0xff]
        %1347 = vmatprep.subr.mxu0 %v767
        %1348 = vmatpush1.msra.mxu0 %v766
        %1349 = vmatprep.subr.mxu0 %v762
        %1350 = vmatpush1.msra.mxu0 %v761
        %1351 = vmatprep.subr.mxu0 %v757
        %1352 = vmatpush1.msra.mxu0 %v756
        %1353 = vmatprep.subr.mxu0 %v752
        %1354 = vmatpush1.msra.mxu0 %v751
        %1355 = vmatprep.subr.mxu0 %v747
        %1356 = vmatpush1.msra.mxu0 %v746
        %1357 = vmatprep.subr.mxu0 %v742
        %1358 = vmatpush1.msra.mxu0 %v741
        %1359 = vmatprep.subr.mxu0 %v737
        %1360 = vmatpush1.msra.mxu0 %v736
        %1361 = vmatprep.subr.mxu0 %v732
        %1362 = vmatpush1.msra.mxu0 %v731
        %1363 = vmatprep.subr.mxu0 %v727
        %1364 = vmatpush1.msra.mxu0 %v726
        %1365 = vmatprep.subr.mxu0 %v722
        %1366 = vmatpush1.msra.mxu0 %v721
        %1367 = vmatprep.subr.mxu0 %v717
        %1368 = vmatpush1.msra.mxu0 %v716
        %1369 = vmatprep.subr.mxu0 %v712
        %1370 = vmatpush1.msra.mxu0 %v711
        %1371 = vmatprep.subr.mxu0 %v707
        %1372 = vmatpush1.msra.mxu0 %v706
        %1373 = vmatprep.subr.mxu0 %v702
        %1374 = vmatpush1.msra.mxu0 %v701
        %1375 = vmatprep.subr.mxu0 %v697
        %1376 = vmatpush1.msra.mxu0 %v696
        %1377 = vmatprep.subr.mxu0 %v692
        %1378 = vmatpush1.msra.mxu0 %v691
        %1379 = vmatprep.subr.mxu0 0.0
        %1380 = vmatpush2.msra.mxu0 0.0
        %1381 = vmatprep.subr.mxu0 0.0
        %1382 = vmatpush2.msra.mxu0 0.0
        %1383 = vmatprep.subr.mxu0 0.0
        %1384 = vmatpush2.msra.mxu0 0.0
        %1385 = vmatprep.subr.mxu0 0.0
        %1386 = vmatpush2.msra.mxu0 0.0
        %1387 = vmatprep.subr.mxu0 0.0
        %1388 = vmatpush2.msra.mxu0 0.0
        %1389 = vmatprep.subr.mxu0 0.0
        %1390 = vmatpush2.msra.mxu0 0.0
        %1391 = vmatprep.subr.mxu0 0.0
        %1392 = vmatpush2.msra.mxu0 0.0
        %1393 = vmatprep.subr.mxu0 0.0
        %1394 = vmatpush2.msra.mxu0 0.0
        %1395 = vmatprep.subr.mxu0 0.0
        %1396 = vmatpush2.msra.mxu0 0.0
        %1397 = vmatprep.subr.mxu0 0.0
        %1398 = vmatpush2.msra.mxu0 0.0
        %1399 = vmatprep.subr.mxu0 0.0
        %1400 = vmatpush2.msra.mxu0 0.0
        %1401 = vmatprep.subr.mxu0 0.0
        %1402 = vmatpush2.msra.mxu0 0.0
        %1403 = vmatprep.subr.mxu0 0.0
        %1404 = vmatpush2.msra.mxu0 0.0
        %1405 = vmatprep.subr.mxu0 0.0
        %1406 = vmatpush2.msra.mxu0 0.0
        %1407 = vmatprep.subr.mxu0 0.0
        %1408 = vmatpush2.msra.mxu0 0.0
        %1409 = vmatprep.subr.mxu0 0.0
        %1410 = vmatpush2.msra.mxu0 0.0
        %1411 = vmatprep.mubr.f32.mxu0 0.0
        %1412 = vmatmul.mubr.f32.gmra.mxu0 %v1330
        %v1413 = vpop.f32.mrf.mxu0
        %v1414 = vadd.f32 0.0, %v1413
        %v1415 = vpop.f32.mrf.mxu0
        %v1416 = vadd.f32 0.0, %v1415
        %1417 = vdwg.mxu0
        %1418 = vmatprep.subr.mxu0 %v769
        %1419 = vmatpush1.msra.mxu0 %v768
        %1420 = vmatprep.subr.mxu0 %v764
        %1421 = vmatpush1.msra.mxu0 %v763
        %1422 = vmatprep.subr.mxu0 %v759
        %1423 = vmatpush1.msra.mxu0 %v758
        %1424 = vmatprep.subr.mxu0 %v754
        %1425 = vmatpush1.msra.mxu0 %v753
        %1426 = vmatprep.subr.mxu0 %v749
        %1427 = vmatpush1.msra.mxu0 %v748
        %1428 = vmatprep.subr.mxu0 %v744
        %1429 = vmatpush1.msra.mxu0 %v743
        %1430 = vmatprep.subr.mxu0 %v739
        %1431 = vmatpush1.msra.mxu0 %v738
        %1432 = vmatprep.subr.mxu0 %v734
        %1433 = vmatpush1.msra.mxu0 %v733
        %1434 = vmatprep.subr.mxu0 %v729
        %1435 = vmatpush1.msra.mxu0 %v728
        %1436 = vmatprep.subr.mxu0 %v724
        %1437 = vmatpush1.msra.mxu0 %v723
        %1438 = vmatprep.subr.mxu0 %v719
        %1439 = vmatpush1.msra.mxu0 %v718
        %1440 = vmatprep.subr.mxu0 %v714
        %1441 = vmatpush1.msra.mxu0 %v713
        %1442 = vmatprep.subr.mxu0 %v709
        %1443 = vmatpush1.msra.mxu0 %v708
        %1444 = vmatprep.subr.mxu0 %v704
        %1445 = vmatpush1.msra.mxu0 %v703
        %1446 = vmatprep.subr.mxu0 %v699
        %1447 = vmatpush1.msra.mxu0 %v698
        %1448 = vmatprep.subr.mxu0 %v694
        %1449 = vmatpush1.msra.mxu0 %v693
        %1450 = vmatprep.subr.mxu0 0.0
        %1451 = vmatpush2.msra.mxu0 0.0
        %1452 = vmatprep.subr.mxu0 0.0
        %1453 = vmatpush2.msra.mxu0 0.0
        %1454 = vmatprep.subr.mxu0 0.0
        %1455 = vmatpush2.msra.mxu0 0.0
        %1456 = vmatprep.subr.mxu0 0.0
        %1457 = vmatpush2.msra.mxu0 0.0
        %1458 = vmatprep.subr.mxu0 0.0
        %1459 = vmatpush2.msra.mxu0 0.0
        %1460 = vmatprep.subr.mxu0 0.0
        %1461 = vmatpush2.msra.mxu0 0.0
        %1462 = vmatprep.subr.mxu0 0.0
        %1463 = vmatpush2.msra.mxu0 0.0
        %1464 = vmatprep.subr.mxu0 0.0
        %1465 = vmatpush2.msra.mxu0 0.0
        %1466 = vmatprep.subr.mxu0 0.0
        %1467 = vmatpush2.msra.mxu0 0.0
        %1468 = vmatprep.subr.mxu0 0.0
        %1469 = vmatpush2.msra.mxu0 0.0
        %1470 = vmatprep.subr.mxu0 0.0
        %1471 = vmatpush2.msra.mxu0 0.0
        %1472 = vmatprep.subr.mxu0 0.0
        %1473 = vmatpush2.msra.mxu0 0.0
        %1474 = vmatprep.subr.mxu0 0.0
        %1475 = vmatpush2.msra.mxu0 0.0
        %1476 = vmatprep.subr.mxu0 0.0
        %1477 = vmatpush2.msra.mxu0 0.0
        %1478 = vmatprep.subr.mxu0 0.0
        %1479 = vmatpush2.msra.mxu0 0.0
        %1480 = vmatprep.subr.mxu0 0.0
        %1481 = vmatpush2.msra.mxu0 0.0
        %1482 = vmatprep.mubr.f32.mxu0 0.0
        %1483 = vmatmul.mubr.f32.gmra.mxu0 %v1330
        %v1484 = vpop.f32.mrf.mxu0
        %v1485 = vadd.f32 0.0, %v1484
        %v1486 = vpop.f32.mrf.mxu0
        %v1487 = vadd.f32 0.0, %v1486
        %1488 = vdwg.mxu0
        %1489 = vmatprep.subr.mxu0 0.0
        %1490 = vmatpush1.msra.mxu0 %v770
        %1491 = vmatprep.subr.mxu0 0.0
        %1492 = vmatpush1.msra.mxu0 %v765
        %1493 = vmatprep.subr.mxu0 0.0
        %1494 = vmatpush1.msra.mxu0 %v760
        %1495 = vmatprep.subr.mxu0 0.0
        %1496 = vmatpush1.msra.mxu0 %v755
        %1497 = vmatprep.subr.mxu0 0.0
        %1498 = vmatpush1.msra.mxu0 %v750
        %1499 = vmatprep.subr.mxu0 0.0
        %1500 = vmatpush1.msra.mxu0 %v745
        %1501 = vmatprep.subr.mxu0 0.0
        %1502 = vmatpush1.msra.mxu0 %v740
        %1503 = vmatprep.subr.mxu0 0.0
        %1504 = vmatpush1.msra.mxu0 %v735
        %1505 = vmatprep.subr.mxu0 0.0
        %1506 = vmatpush1.msra.mxu0 %v730
        %1507 = vmatprep.subr.mxu0 0.0
        %1508 = vmatpush1.msra.mxu0 %v725
        %1509 = vmatprep.subr.mxu0 0.0
        %1510 = vmatpush1.msra.mxu0 %v720
        %1511 = vmatprep.subr.mxu0 0.0
        %1512 = vmatpush1.msra.mxu0 %v715
        %1513 = vmatprep.subr.mxu0 0.0
        %1514 = vmatpush1.msra.mxu0 %v710
        %1515 = vmatprep.subr.mxu0 0.0
        %1516 = vmatpush1.msra.mxu0 %v705
        %1517 = vmatprep.subr.mxu0 0.0
        %1518 = vmatpush1.msra.mxu0 %v700
        %1519 = vmatprep.subr.mxu0 0.0
        %1520 = vmatpush1.msra.mxu0 %v695
        %1521 = vmatprep.subr.mxu0 0.0
        %1522 = vmatpush2.msra.mxu0 0.0
        %1523 = vmatprep.subr.mxu0 0.0
        %1524 = vmatpush2.msra.mxu0 0.0
        %1525 = vmatprep.subr.mxu0 0.0
        %1526 = vmatpush2.msra.mxu0 0.0
        %1527 = vmatprep.subr.mxu0 0.0
        %1528 = vmatpush2.msra.mxu0 0.0
        %1529 = vmatprep.subr.mxu0 0.0
        %1530 = vmatpush2.msra.mxu0 0.0
        %1531 = vmatprep.subr.mxu0 0.0
        %1532 = vmatpush2.msra.mxu0 0.0
        %1533 = vmatprep.subr.mxu0 0.0
        %1534 = vmatpush2.msra.mxu0 0.0
        %1535 = vmatprep.subr.mxu0 0.0
        %1536 = vmatpush2.msra.mxu0 0.0
        %1537 = vmatprep.subr.mxu0 0.0
        %1538 = vmatpush2.msra.mxu0 0.0
        %1539 = vmatprep.subr.mxu0 0.0
        %1540 = vmatpush2.msra.mxu0 0.0
        %1541 = vmatprep.subr.mxu0 0.0
        %1542 = vmatpush2.msra.mxu0 0.0
        %1543 = vmatprep.subr.mxu0 0.0
        %1544 = vmatpush2.msra.mxu0 0.0
        %1545 = vmatprep.subr.mxu0 0.0
        %1546 = vmatpush2.msra.mxu0 0.0
        %1547 = vmatprep.subr.mxu0 0.0
        %1548 = vmatpush2.msra.mxu0 0.0
        %1549 = vmatprep.subr.mxu0 0.0
        %1550 = vmatpush2.msra.mxu0 0.0
        %1551 = vmatprep.subr.mxu0 0.0
        %1552 = vmatpush2.msra.mxu0 0.0
        %1553 = vmatprep.mubr.f32.mxu0 0.0
        %1554 = vmatmul.mubr.f32.gmra.mxu0 %v1330
        %v1555 = vpop.f32.mrf.mxu0
        %v1556 = vadd.f32 0.0, %v1555
        %v1557 = vpop.f32.mrf.mxu0
        %1558 = vdwg.mxu0
        %v1559 = vadd.f32 %v1339, %v1414
        %v1560 = vadd.f32 %v1340, %v1416
        %v1561 = vadd.f32 %v1341, %v1485
        %v1562 = vadd.f32 %v1342, %v1487
        %v1563 = vadd.f32 %v1343, %v1556
        %v1564 = vxor.u32 %v1559, 2147483648
        %v1565 = vmul.f32 %v1564, 1.442695
        %v1566 = vpow.pop %v1565
        %v1567 = vadd.f32 %v1566, 1.0
        %v1568 = vrcp.pop %v1567
        %v1569 = vmul.f32 1.0, %v1568
        %v1570 = vxor.u32 %v1560, 2147483648
        %v1571 = vmul.f32 %v1570, 1.442695
        %v1572 = vpow.pop %v1571
        %v1573 = vadd.f32 %v1572, 1.0
        %v1574 = vrcp.pop %v1573
        %v1575 = vmul.f32 1.0, %v1574
        %v1576 = vtanh.pop %v1561
        %v1577 = vxor.u32 %v1562, 2147483648
        %v1578 = vmul.f32 %v1577, 1.442695
        %v1579 = vpow.pop %v1578
        %v1580 = vadd.f32 %v1579, 1.0
        %v1581 = vrcp.pop %v1580
        %v1582 = vmul.f32 1.0, %v1581
        %v1583 = vxor.u32 %v1563, 2147483648
        %v1584 = vmul.f32 %v1583, 1.442695
        %v1585 = vpow.pop %v1584
        %v1586 = vadd.f32 %v1585, 1.0
        %v1587 = vrcp.pop %v1586
        %v1588 = vmul.f32 1.0, %v1587
        %v1589 = vmul.f32 %v1575, %v1333
        %v1590 = vmul.f32 %v1569, %v1576
        %v1591 = vadd.f32 %v1589, %v1590
        %v1592 = vtanh.pop %v1591
        %v1593 = vmul.f32 %v1582, %v1592
        %v1594 = vmul.f32 %v1588, %v1593
        %v1595 = vsub.f32 1.0, %v1588
        %v1596 = vmul.f32 %v1595, %v1344
        %v1597 = vadd.f32 %v1594, %v1596
        %v1598 = vmul.f32 %v690, %v1597
        %1600 = vset.pattern.permute.xlu0 0
        %1601 = vperm.xlu0 %1600, %v1346
        %v1602 = vpop.permute.xlu0 %1601
        %v1604 = vmul.f32 %v1602, %v1598
        %v1605 = vsub.f32 1.0, %v1346
        %1607 = vset.pattern.permute.xlu0 0
        %1608 = vperm.xlu0 %1607, %v1605
        %v1609 = vpop.permute.xlu0 %1608
        %v1611 = vmul.f32 %v1609, %v1330
        %v1612 = vadd.f32 %v1604, %v1611
        %v1613 = vmul.f32 %v1602, %v1591
        %v1614 = vmul.f32 %v1609, %v1333
        %v1615 = vadd.f32 %v1613, %v1614
        %s1616 = scalar_lea.vmem %s293, 8 [#allocation10]
        %1617 = vst [vmem:[%s1616] sm:$0xff] %v1612
        %s1618 = smul.u32 3, 6
        %s1619 = smul.addr %s1618, 8
        %s1620 = scalar_lea.vmem [#allocation4], %s1619
        %v1621 = vld [vmem:[%s1620] sm:$0xff]
        %v1622 = vld [vmem:[%s1620 + $0x8] sm:$0xff]
        %v1623 = vld [vmem:[%s1620 + $0x10] sm:$0xff]
        %v1624 = vld [vmem:[%s1620 + $0x18] sm:$0xff]
        %v1625 = vld [vmem:[%s1620 + $0x20] sm:$0xff]
        %v1626 = vld [vmem:[%s1620 + $0x28] sm:$0xff]
        %s1627 = scalar_lea.vmem %s304, 24
        %v1628 = vld [vmem:[%s1627] sm:$0xff]
        %1629 = vmatprep.subr.mxu0 %v767
        %1630 = vmatpush1.msra.mxu0 %v766
        %1631 = vmatprep.subr.mxu0 %v762
        %1632 = vmatpush1.msra.mxu0 %v761
        %1633 = vmatprep.subr.mxu0 %v757
        %1634 = vmatpush1.msra.mxu0 %v756
        %1635 = vmatprep.subr.mxu0 %v752
        %1636 = vmatpush1.msra.mxu0 %v751
        %1637 = vmatprep.subr.mxu0 %v747
        %1638 = vmatpush1.msra.mxu0 %v746
        %1639 = vmatprep.subr.mxu0 %v742
        %1640 = vmatpush1.msra.mxu0 %v741
        %1641 = vmatprep.subr.mxu0 %v737
        %1642 = vmatpush1.msra.mxu0 %v736
        %1643 = vmatprep.subr.mxu0 %v732
        %1644 = vmatpush1.msra.mxu0 %v731
        %1645 = vmatprep.subr.mxu0 %v727
        %1646 = vmatpush1.msra.mxu0 %v726
        %1647 = vmatprep.subr.mxu0 %v722
        %1648 = vmatpush1.msra.mxu0 %v721
        %1649 = vmatprep.subr.mxu0 %v717
        %1650 = vmatpush1.msra.mxu0 %v716
        %1651 = vmatprep.subr.mxu0 %v712
        %1652 = vmatpush1.msra.mxu0 %v711
        %1653 = vmatprep.subr.mxu0 %v707
        %1654 = vmatpush1.msra.mxu0 %v706
        %1655 = vmatprep.subr.mxu0 %v702
        %1656 = vmatpush1.msra.mxu0 %v701
        %1657 = vmatprep.subr.mxu0 %v697
        %1658 = vmatpush1.msra.mxu0 %v696
        %1659 = vmatprep.subr.mxu0 %v692
        %1660 = vmatpush1.msra.mxu0 %v691
        %1661 = vmatprep.subr.mxu0 0.0
        %1662 = vmatpush2.msra.mxu0 0.0
        %1663 = vmatprep.subr.mxu0 0.0
        %1664 = vmatpush2.msra.mxu0 0.0
        %1665 = vmatprep.subr.mxu0 0.0
        %1666 = vmatpush2.msra.mxu0 0.0
        %1667 = vmatprep.subr.mxu0 0.0
        %1668 = vmatpush2.msra.mxu0 0.0
        %1669 = vmatprep.subr.mxu0 0.0
        %1670 = vmatpush2.msra.mxu0 0.0
        %1671 = vmatprep.subr.mxu0 0.0
        %1672 = vmatpush2.msra.mxu0 0.0
        %1673 = vmatprep.subr.mxu0 0.0
        %1674 = vmatpush2.msra.mxu0 0.0
        %1675 = vmatprep.subr.mxu0 0.0
        %1676 = vmatpush2.msra.mxu0 0.0
        %1677 = vmatprep.subr.mxu0 0.0
        %1678 = vmatpush2.msra.mxu0 0.0
        %1679 = vmatprep.subr.mxu0 0.0
        %1680 = vmatpush2.msra.mxu0 0.0
        %1681 = vmatprep.subr.mxu0 0.0
        %1682 = vmatpush2.msra.mxu0 0.0
        %1683 = vmatprep.subr.mxu0 0.0
        %1684 = vmatpush2.msra.mxu0 0.0
        %1685 = vmatprep.subr.mxu0 0.0
        %1686 = vmatpush2.msra.mxu0 0.0
        %1687 = vmatprep.subr.mxu0 0.0
        %1688 = vmatpush2.msra.mxu0 0.0
        %1689 = vmatprep.subr.mxu0 0.0
        %1690 = vmatpush2.msra.mxu0 0.0
        %1691 = vmatprep.subr.mxu0 0.0
        %1692 = vmatpush2.msra.mxu0 0.0
        %1693 = vmatprep.mubr.f32.mxu0 0.0
        %1694 = vmatmul.mubr.f32.gmra.mxu0 %v1612
        %v1695 = vpop.f32.mrf.mxu0
        %v1696 = vadd.f32 0.0, %v1695
        %v1697 = vpop.f32.mrf.mxu0
        %v1698 = vadd.f32 0.0, %v1697
        %1699 = vdwg.mxu0
        %1700 = vmatprep.subr.mxu0 %v769
        %1701 = vmatpush1.msra.mxu0 %v768
        %1702 = vmatprep.subr.mxu0 %v764
        %1703 = vmatpush1.msra.mxu0 %v763
        %1704 = vmatprep.subr.mxu0 %v759
        %1705 = vmatpush1.msra.mxu0 %v758
        %1706 = vmatprep.subr.mxu0 %v754
        %1707 = vmatpush1.msra.mxu0 %v753
        %1708 = vmatprep.subr.mxu0 %v749
        %1709 = vmatpush1.msra.mxu0 %v748
        %1710 = vmatprep.subr.mxu0 %v744
        %1711 = vmatpush1.msra.mxu0 %v743
        %1712 = vmatprep.subr.mxu0 %v739
        %1713 = vmatpush1.msra.mxu0 %v738
        %1714 = vmatprep.subr.mxu0 %v734
        %1715 = vmatpush1.msra.mxu0 %v733
        %1716 = vmatprep.subr.mxu0 %v729
        %1717 = vmatpush1.msra.mxu0 %v728
        %1718 = vmatprep.subr.mxu0 %v724
        %1719 = vmatpush1.msra.mxu0 %v723
        %1720 = vmatprep.subr.mxu0 %v719
        %1721 = vmatpush1.msra.mxu0 %v718
        %1722 = vmatprep.subr.mxu0 %v714
        %1723 = vmatpush1.msra.mxu0 %v713
        %1724 = vmatprep.subr.mxu0 %v709
        %1725 = vmatpush1.msra.mxu0 %v708
        %1726 = vmatprep.subr.mxu0 %v704
        %1727 = vmatpush1.msra.mxu0 %v703
        %1728 = vmatprep.subr.mxu0 %v699
        %1729 = vmatpush1.msra.mxu0 %v698
        %1730 = vmatprep.subr.mxu0 %v694
        %1731 = vmatpush1.msra.mxu0 %v693
        %1732 = vmatprep.subr.mxu0 0.0
        %1733 = vmatpush2.msra.mxu0 0.0
        %1734 = vmatprep.subr.mxu0 0.0
        %1735 = vmatpush2.msra.mxu0 0.0
        %1736 = vmatprep.subr.mxu0 0.0
        %1737 = vmatpush2.msra.mxu0 0.0
        %1738 = vmatprep.subr.mxu0 0.0
        %1739 = vmatpush2.msra.mxu0 0.0
        %1740 = vmatprep.subr.mxu0 0.0
        %1741 = vmatpush2.msra.mxu0 0.0
        %1742 = vmatprep.subr.mxu0 0.0
        %1743 = vmatpush2.msra.mxu0 0.0
        %1744 = vmatprep.subr.mxu0 0.0
        %1745 = vmatpush2.msra.mxu0 0.0
        %1746 = vmatprep.subr.mxu0 0.0
        %1747 = vmatpush2.msra.mxu0 0.0
        %1748 = vmatprep.subr.mxu0 0.0
        %1749 = vmatpush2.msra.mxu0 0.0
        %1750 = vmatprep.subr.mxu0 0.0
        %1751 = vmatpush2.msra.mxu0 0.0
        %1752 = vmatprep.subr.mxu0 0.0
        %1753 = vmatpush2.msra.mxu0 0.0
        %1754 = vmatprep.subr.mxu0 0.0
        %1755 = vmatpush2.msra.mxu0 0.0
        %1756 = vmatprep.subr.mxu0 0.0
        %1757 = vmatpush2.msra.mxu0 0.0
        %1758 = vmatprep.subr.mxu0 0.0
        %1759 = vmatpush2.msra.mxu0 0.0
        %1760 = vmatprep.subr.mxu0 0.0
        %1761 = vmatpush2.msra.mxu0 0.0
        %1762 = vmatprep.subr.mxu0 0.0
        %1763 = vmatpush2.msra.mxu0 0.0
        %1764 = vmatprep.mubr.f32.mxu0 0.0
        %1765 = vmatmul.mubr.f32.gmra.mxu0 %v1612
        %v1766 = vpop.f32.mrf.mxu0
        %v1767 = vadd.f32 0.0, %v1766
        %v1768 = vpop.f32.mrf.mxu0
        %v1769 = vadd.f32 0.0, %v1768
        %1770 = vdwg.mxu0
        %1771 = vmatprep.subr.mxu0 0.0
        %1772 = vmatpush1.msra.mxu0 %v770
        %1773 = vmatprep.subr.mxu0 0.0
        %1774 = vmatpush1.msra.mxu0 %v765
        %1775 = vmatprep.subr.mxu0 0.0
        %1776 = vmatpush1.msra.mxu0 %v760
        %1777 = vmatprep.subr.mxu0 0.0
        %1778 = vmatpush1.msra.mxu0 %v755
        %1779 = vmatprep.subr.mxu0 0.0
        %1780 = vmatpush1.msra.mxu0 %v750
        %1781 = vmatprep.subr.mxu0 0.0
        %1782 = vmatpush1.msra.mxu0 %v745
        %1783 = vmatprep.subr.mxu0 0.0
        %1784 = vmatpush1.msra.mxu0 %v740
        %1785 = vmatprep.subr.mxu0 0.0
        %1786 = vmatpush1.msra.mxu0 %v735
        %1787 = vmatprep.subr.mxu0 0.0
        %1788 = vmatpush1.msra.mxu0 %v730
        %1789 = vmatprep.subr.mxu0 0.0
        %1790 = vmatpush1.msra.mxu0 %v725
        %1791 = vmatprep.subr.mxu0 0.0
        %1792 = vmatpush1.msra.mxu0 %v720
        %1793 = vmatprep.subr.mxu0 0.0
        %1794 = vmatpush1.msra.mxu0 %v715
        %1795 = vmatprep.subr.mxu0 0.0
        %1796 = vmatpush1.msra.mxu0 %v710
        %1797 = vmatprep.subr.mxu0 0.0
        %1798 = vmatpush1.msra.mxu0 %v705
        %1799 = vmatprep.subr.mxu0 0.0
        %1800 = vmatpush1.msra.mxu0 %v700
        %1801 = vmatprep.subr.mxu0 0.0
        %1802 = vmatpush1.msra.mxu0 %v695
        %1803 = vmatprep.subr.mxu0 0.0
        %1804 = vmatpush2.msra.mxu0 0.0
        %1805 = vmatprep.subr.mxu0 0.0
        %1806 = vmatpush2.msra.mxu0 0.0
        %1807 = vmatprep.subr.mxu0 0.0
        %1808 = vmatpush2.msra.mxu0 0.0
        %1809 = vmatprep.subr.mxu0 0.0
        %1810 = vmatpush2.msra.mxu0 0.0
        %1811 = vmatprep.subr.mxu0 0.0
        %1812 = vmatpush2.msra.mxu0 0.0
        %1813 = vmatprep.subr.mxu0 0.0
        %1814 = vmatpush2.msra.mxu0 0.0
        %1815 = vmatprep.subr.mxu0 0.0
        %1816 = vmatpush2.msra.mxu0 0.0
        %1817 = vmatprep.subr.mxu0 0.0
        %1818 = vmatpush2.msra.mxu0 0.0
        %1819 = vmatprep.subr.mxu0 0.0
        %1820 = vmatpush2.msra.mxu0 0.0
        %1821 = vmatprep.subr.mxu0 0.0
        %1822 = vmatpush2.msra.mxu0 0.0
        %1823 = vmatprep.subr.mxu0 0.0
        %1824 = vmatpush2.msra.mxu0 0.0
        %1825 = vmatprep.subr.mxu0 0.0
        %1826 = vmatpush2.msra.mxu0 0.0
        %1827 = vmatprep.subr.mxu0 0.0
        %1828 = vmatpush2.msra.mxu0 0.0
        %1829 = vmatprep.subr.mxu0 0.0
        %1830 = vmatpush2.msra.mxu0 0.0
        %1831 = vmatprep.subr.mxu0 0.0
        %1832 = vmatpush2.msra.mxu0 0.0
        %1833 = vmatprep.subr.mxu0 0.0
        %1834 = vmatpush2.msra.mxu0 0.0
        %1835 = vmatprep.mubr.f32.mxu0 0.0
        %1836 = vmatmul.mubr.f32.gmra.mxu0 %v1612
        %v1837 = vpop.f32.mrf.mxu0
        %v1838 = vadd.f32 0.0, %v1837
        %v1839 = vpop.f32.mrf.mxu0
        %1840 = vdwg.mxu0
        %v1841 = vadd.f32 %v1621, %v1696
        %v1842 = vadd.f32 %v1622, %v1698
        %v1843 = vadd.f32 %v1623, %v1767
        %v1844 = vadd.f32 %v1624, %v1769
        %v1845 = vadd.f32 %v1625, %v1838
        %v1846 = vxor.u32 %v1841, 2147483648
        %v1847 = vmul.f32 %v1846, 1.442695
        %v1848 = vpow.pop %v1847
        %v1849 = vadd.f32 %v1848, 1.0
        %v1850 = vrcp.pop %v1849
        %v1851 = vmul.f32 1.0, %v1850
        %v1852 = vxor.u32 %v1842, 2147483648
        %v1853 = vmul.f32 %v1852, 1.442695
        %v1854 = vpow.pop %v1853
        %v1855 = vadd.f32 %v1854, 1.0
        %v1856 = vrcp.pop %v1855
        %v1857 = vmul.f32 1.0, %v1856
        %v1858 = vtanh.pop %v1843
        %v1859 = vxor.u32 %v1844, 2147483648
        %v1860 = vmul.f32 %v1859, 1.442695
        %v1861 = vpow.pop %v1860
        %v1862 = vadd.f32 %v1861, 1.0
        %v1863 = vrcp.pop %v1862
        %v1864 = vmul.f32 1.0, %v1863
        %v1865 = vxor.u32 %v1845, 2147483648
        %v1866 = vmul.f32 %v1865, 1.442695
        %v1867 = vpow.pop %v1866
        %v1868 = vadd.f32 %v1867, 1.0
        %v1869 = vrcp.pop %v1868
        %v1870 = vmul.f32 1.0, %v1869
        %v1871 = vmul.f32 %v1857, %v1615
        %v1872 = vmul.f32 %v1851, %v1858
        %v1873 = vadd.f32 %v1871, %v1872
        %v1874 = vtanh.pop %v1873
        %v1875 = vmul.f32 %v1864, %v1874
        %v1876 = vmul.f32 %v1870, %v1875
        %v1877 = vsub.f32 1.0, %v1870
        %v1878 = vmul.f32 %v1877, %v1626
        %v1879 = vadd.f32 %v1876, %v1878
        %v1880 = vmul.f32 %v690, %v1879
        %1882 = vset.pattern.permute.xlu0 0
        %1883 = vperm.xlu0 %1882, %v1628
        %v1884 = vpop.permute.xlu0 %1883
        %v1886 = vmul.f32 %v1884, %v1880
        %v1887 = vsub.f32 1.0, %v1628
        %1889 = vset.pattern.permute.xlu0 0
        %1890 = vperm.xlu0 %1889, %v1887
        %v1891 = vpop.permute.xlu0 %1890
        %v1893 = vmul.f32 %v1891, %v1612
        %v1894 = vadd.f32 %v1886, %v1893
        %v1895 = vmul.f32 %v1884, %v1873
        %v1896 = vmul.f32 %v1891, %v1615
        %v1897 = vadd.f32 %v1895, %v1896
        %1898 = vst [vmem:[%s293] sm:$0xff] %v1894
        %1899 = vst [vmem:[#allocation2] sm:$0xff] %v1894
        %1900 = vst [vmem:[#allocation3] sm:$0xff] %v1897
        %s1901 = sand.u32 %s168, 1
        %s1902 = scalar_lea.sflag [#allocation7], %s1901
        %s1903 = sand.u32 %s168, 1
        %s1904 = smul.addr %s1903, 32
        %s1905 = scalar_lea.vmem [#allocation10], %s1904
        // Predicated region
        $region57: #{tpu_custom_call.1} parent=43 // pred_check
          %p1906 = pneg %p178
        $region58: #{tpu_custom_call.1} parent=43 // pred_check_branch
          %1908 = sbr.rel (%p1906) target = $region60
        $region59: #{tpu_custom_call.1} parent=43 // pred_region
          %s1909 = ssub.s32 1, %s22
          %s1910 = smul.u32 4, %s1909
          %s1912 = ssub.s32 512, 512
          %1913 = vsyncadd %s1902, %s1912
          %s1914 = smul.addr %s1910, 128
          %s1915 = scalar_lea.hbm %s6, %s1914
          %s1916 = sshll.u32 %s1905, 4
          %s1917 = int_to_ptr.vmem [resolvable:$true] %s1916
          %1922 = dma.vmem_to_hbm [thread:$0]  %s1917, 512, %s1915, %s1902, 128, 128, 8
        $region60: #{tpu_custom_call.1} parent=43 // pred_fallthru
          _
      $region44: #{tpu_custom_call.1} parent=5 // pred_fallthru
        _
      %p1923 = scmp.le.s32.totalorder 2, %s17
      // Predicated region
      $region61: #{tpu_custom_call.1} parent=5 // pred_check
        %p1924 = pneg %p1923
      $region62: #{tpu_custom_call.1} parent=5 // pred_check_branch
        %1926 = sbr.rel (%p1924) target = $region64
      $region63: #{tpu_custom_call.1} parent=5 // pred_region
        %s1927 = ssub.s32 %s17, 2
        // Predicated region
        $region65: #{tpu_custom_call.1} parent=63 // pred_check
          %p1928 = pneg %p184
        $region66: #{tpu_custom_call.1} parent=63 // pred_check_branch
          %1930 = sbr.rel (%p1928) target = $region68
        $region67: #{tpu_custom_call.1} parent=63 // pred_region
          %s1931 = sand.u32 %s169, 1
          %s1932 = scalar_lea.sflag [#allocation7], %s1931
          %s1933 = sand.u32 %s169, 1
          %s1934 = smul.addr %s1933, 32
          %s1935 = scalar_lea.vmem [#allocation10], %s1934
          %1936 = dma.done %s1932, 512
        $region68: #{tpu_custom_call.1} parent=63 // pred_fallthru
          _
      $region64: #{tpu_custom_call.1} parent=5 // pred_fallthru
        _
    $region6: #{tpu_custom_call.1} parent=1 // loop_footer
      %s21 = sadd.s32 1, %s17
    $region7: #{tpu_custom_call.1} parent=1 // loop_footer_branch
      %16 = sbr.rel target = $region3
    $region8: #{tpu_custom_call.1} parent=1 // loop_exit
      _
    %1937 = vsyncpa [#allocation6], 1
    %s1938 = scalar_lea.sflag [#allocation6], 1
    %1939 = vsyncpa %s1938, 1
    %1940 = vsyncpa [#allocation9], 1
    %1941 = vsyncpa [#allocation7], 1
    %s1942 = scalar_lea.sflag [#allocation7], 1
    %1943 = vsyncpa %s1942, 1

</llo_original>
